<compile_context>
chip_gen: v7x
topology: tpu7x:2x2x1
jax: 0.10.0
libtpu: 0.0.40
codegen_flags: <defaults>
</compile_context>

<pallas_src>
import jax
import jax.numpy as jnp
from jax import lax
from jax.experimental import pallas as pl
from jax.experimental.pallas import tpu as pltpu

FILTER_CHANNEL = 32     # C
FILTER_SIZE = 3         # K (padding='same')
SE_REDUCTION = 4
_BN_EPS = 1e-5
_MAX_BLOCK_B = 64       # fits easily in scoped VMEM on v5e/v6e/v7x


# ---------------------------------------------------------------------------
# Kernel
# ---------------------------------------------------------------------------
def _residual_block_kernel(x_ref, bw1_ref, s1_ref, b1_ref,
                           bw2_ref, s2_ref, b2_ref,
                           sw1_ref, sb1_ref, sw2_ref, sb2_ref, o_ref):
    """One grid step = TB batch elements; everything lane-dense (last dim W*C).

    x_ref  : (TB, H, W*C) f32   input block (NHWC with W, C merged on lanes)
    bw*    : (3, W*C, W*C)      block-banded 3x3 conv weights (one per dy)
    s*/b*  : (1, W*C)   f32     folded BatchNorm scale / bias, tiled over W
    sw1    : (W*C, C//r) f32    SE fc1 weight, pre-tiled (+ 1/(H*W) pool scale)
    sb1    : (1, C//r)  f32     SE fc1 bias
    sw2    : (C//r, W*C) f32    SE fc2 weight, gate pre-broadcast over W
    sb2    : (1, W*C)   f32     SE fc2 bias, tiled over W
    o_ref  : (TB, H, W*C)       output block
    """
    TB, H, L = x_ref.shape
    cdt = bw1_ref.dtype

    x = x_ref[...]                                             # (TB, H, L) f32

    def conv3x3_same(act, bw_ref):
        # 3x3 "same" conv as three banded matmuls.  x-taps / x-padding are in
        # bw_ref[dy]; the y shift is a per-batch-element row shift with an
        # inserted zero row -> no pad buffer, no masks, no im2col slab.
        zrow = jnp.zeros((TB, 1, L), jnp.float32)
        sh_dn = jnp.concatenate([zrow, act[:, :H - 1, :]], axis=1)   # in[., y-1, .]
        sh_up = jnp.concatenate([act[:, 1:, :], zrow], axis=1)       # in[., y+1, .]
        acc = jnp.dot(sh_dn.astype(cdt).reshape(TB * H, L), bw_ref[0],
                      preferred_element_type=jnp.float32)
        acc += jnp.dot(act.astype(cdt).reshape(TB * H, L), bw_ref[1],
                       preferred_element_type=jnp.float32)
        acc += jnp.dot(sh_up.astype(cdt).reshape(TB * H, L), bw_ref[2],
                       preferred_element_type=jnp.float32)
        return acc.reshape(TB, H, L)

    # conv1 -> BN1 -> ReLU
    y = conv3x3_same(x, bw1_ref)
    y = jnp.maximum(y * s1_ref[...] + b1_ref[...], 0.0)
    # conv2 -> BN2
    y = conv3x3_same(y, bw2_ref)
    y = y * s2_ref[...] + b2_ref[...]

    # Squeeze-Excite, batched over TB; stays lane-dense via pre-tiled weights.
    pooled = jnp.sum(y, axis=1)                                # (TB, W*C)
    hid = jnp.maximum(
        jnp.dot(pooled, sw1_ref[...], preferred_element_type=jnp.float32)
        + sb1_ref[...], 0.0)                                   # (TB, C//r)
    z = jnp.dot(hid, sw2_ref[...],
                preferred_element_type=jnp.float32) + sb2_ref[...]
    gate = 1.0 / (1.0 + jnp.exp(-z))                           # (TB, W*C)

    out = jnp.maximum(y * gate[:, None, :] + x, 0.0)           # gate, +res, ReLU
    o_ref[...] = out.astype(o_ref.dtype)


# ---------------------------------------------------------------------------
# Grid / chip heuristics
# ---------------------------------------------------------------------------
def _is_two_core_chip():
    try:
        kind = jax.devices()[0].device_kind.lower()
    except Exception:
        return False
    return "7" in kind          # v7x is the only 2-TensorCore-per-chip part


def _pick_block_b(batch, max_block=_MAX_BLOCK_B):
    tb = min(batch, max_block)
    if _is_two_core_chip() and batch > 1:
        tb = min(tb, max(1, pl.cdiv(batch, 2)))   # >= 2 grid steps for 2 cores
    return tb


def _grid_semantics(num_steps):
    if _is_two_core_chip() and num_steps >= 2:
        return (getattr(pltpu, "CORE_PARALLEL", "parallel"),)
    return ("parallel",)


def _compiler_params(num_steps):
    cp_cls = (getattr(pltpu, "CompilerParams", None)
              or getattr(pltpu, "TPUCompilerParams", None))
    if cp_cls is None:
        return None
    try:
        return cp_cls(dimension_semantics=_grid_semantics(num_steps))
    except Exception:
        return None


# ---------------------------------------------------------------------------
# Wrapper
# ---------------------------------------------------------------------------
def residual_block_nhwc(x_nhwc, params, *, block_b=None):
    """x_nhwc: (B, H, W, C) f32.  params: output of prepare_params()."""
    B, H, W, C = x_nhwc.shape
    L = W * C
    bw1, s1, b1, bw2, s2, b2, sw1, sb1, sw2, sb2 = params

    if block_b is None:
        block_b = _pick_block_b(B)
    Bp = pl.cdiv(B, block_b) * block_b

    x2 = x_nhwc.reshape(B, H, L)                 # free: contiguous NHWC view
    if Bp != B:
        x2 = jnp.concatenate(
            [x2, jnp.zeros((Bp - B, H, L), x2.dtype)], axis=0)
    nsteps = Bp // block_b

    def full_spec(a):
        zeros = (0,) * a.ndim
        return pl.BlockSpec(a.shape, lambda bidx, _z=zeros: _z)

    out = pl.pallas_call(
        _residual_block_kernel,
        out_shape=jax.ShapeDtypeStruct((Bp, H, L), x_nhwc.dtype),
        grid=(nsteps,),
        in_specs=[
            pl.BlockSpec((block_b, H, L), lambda bidx: (bidx, 0, 0)),
            full_spec(bw1), full_spec(s1), full_spec(b1),
            full_spec(bw2), full_spec(s2), full_spec(b2),
            full_spec(sw1), full_spec(sb1), full_spec(sw2), full_spec(sb2),
        ],
        out_specs=pl.BlockSpec((block_b, H, L), lambda bidx: (bidx, 0, 0)),
        compiler_params=_compiler_params(nsteps),
    )(x2, bw1, s1, b1, bw2, s2, b2, sw1, sb1, sw2, sb2)

    out = out[:B] if Bp != B else out
    return out.reshape(B, H, W, C)


def residual_block_nchw(x_nchw, params, *, block_b=None):
    # NOTE: pays two extra full-tensor HBM passes for the layout change;
    # prefer keeping the model NHWC and calling residual_block_nhwc directly.
    x_nhwc = jnp.transpose(x_nchw, (0, 2, 3, 1))
    y = residual_block_nhwc(x_nhwc, params, block_b=block_b)
    return jnp.transpose(y, (0, 3, 1, 2))


# ---------------------------------------------------------------------------
# Parameter preparation (PyTorch-layout raw params -> kernel params)
# ---------------------------------------------------------------------------
def _band_weights(w_oihw, width, dtype):
    """(Co, Ci, K, K) PyTorch conv weight -> (K, W*Ci, W*Co) banded matrices."""
    Co, Ci, K, _ = w_oihw.shape
    w_hwio = jnp.transpose(w_oihw, (2, 3, 1, 0)).astype(jnp.float32)
    bands = []
    for dyi in range(K):
        bw = jnp.zeros((width * Ci, width * Co), jnp.float32)
        for xout in range(width):
            for dxi in range(K):
                xin = xout + dxi - (K // 2)
                if 0 <= xin < width:
                    bw = bw.at[xin * Ci:(xin + 1) * Ci,
                               xout * Co:(xout + 1) * Co].set(w_hwio[dyi, dxi])
        bands.append(bw)
    return jnp.stack(bands).astype(dtype)


def _fold_bn(gamma, beta, mean, var, width, eps=_BN_EPS):
    scale = gamma / jnp.sqrt(var + eps)
    bias = beta - mean * scale
    return (jnp.tile(scale, width).reshape(1, -1).astype(jnp.float32),
            jnp.tile(bias, width).reshape(1, -1).astype(jnp.float32))


def _prep_se(fc1_w, fc1_b, fc2_w, fc2_b, width, hw):
    # fc1_w: (C//r, C), fc2_w: (C, C//r)  (PyTorch Linear (out, in) layout)
    sw1 = (jnp.tile(fc1_w.T, (width, 1)) / float(hw)).astype(jnp.float32)
    sb1 = fc1_b.reshape(1, -1).astype(jnp.float32)
    sw2 = jnp.tile(fc2_w.T, (1, width)).astype(jnp.float32)
    sb2 = jnp.tile(fc2_b, width).reshape(1, -1).astype(jnp.float32)
    return sw1, sb1, sw2, sb2


def prepare_params(raw, height, width, conv_dtype=jnp.bfloat16, eps=_BN_EPS):
    (w1, g1, be1, m1, v1, w2, g2, be2, m2, v2,
     fc1w, fc1b, fc2w, fc2b) = raw
    bw1 = _band_weights(w1, width, conv_dtype)
    bw2 = _band_weights(w2, width, conv_dtype)
    s1, b1 = _fold_bn(g1, be1, m1, v1, width, eps)
    s2, b2 = _fold_bn(g2, be2, m2, v2, width, eps)
    sw1, sb1, sw2, sb2 = _prep_se(fc1w, fc1b, fc2w, fc2b, width, height * width)
    return (bw1, s1, b1, bw2, s2, b2, sw1, sb1, sw2, sb2)


# ---------------------------------------------------------------------------
# Raw parameters + pure-JAX reference
# ---------------------------------------------------------------------------
def make_raw_params(key, channels=FILTER_CHANNEL, ksize=FILTER_SIZE,
                    reduction=SE_REDUCTION):
    ks = jax.random.split(key, 14)
    C, K = channels, ksize
    Cr = max(1, C // reduction)
    w1 = 0.05 * jax.random.normal(ks[0], (C, C, K, K), jnp.float32)
    w2 = 0.05 * jax.random.normal(ks[1], (C, C, K, K), jnp.float32)

    def bn(kg, kb, km, kv):
        return (1.0 + 0.1 * jax.random.normal(kg, (C,), jnp.float32),
                0.1 * jax.random.normal(kb, (C,), jnp.float32),
                0.1 * jax.random.normal(km, (C,), jnp.float32),
                jnp.abs(jax.random.normal(kv, (C,), jnp.float32)) + 0.5)

    g1, be1, m1, v1 = bn(ks[2], ks[3], ks[4], ks[5])
    g2, be2, m2, v2 = bn(ks[6], ks[7], ks[8], ks[9])
    fc1w = 0.1 * jax.random.normal(ks[10], (Cr, C), jnp.float32)
    fc1b = 0.1 * jax.random.normal(ks[11], (Cr,), jnp.float32)
    fc2w = 0.1 * jax.random.normal(ks[12], (C, Cr), jnp.float32)
    fc2b = 0.1 * jax.random.normal(ks[13], (C,), jnp.float32)
    return (w1, g1, be1, m1, v1, w2, g2, be2, m2, v2, fc1w, fc1b, fc2w, fc2b)


def reference_nhwc(x, raw, conv_dtype=jnp.float32, eps=_BN_EPS):
    (w1, g1, be1, m1, v1, w2, g2, be2, m2, v2,
     fc1w, fc1b, fc2w, fc2b) = raw
    dn = ("NHWC", "HWIO", "NHWC")

    def conv(inp, w_oihw):
        w = jnp.transpose(w_oihw, (2, 3, 1, 0))
        return lax.conv_general_dilated(
            inp.astype(conv_dtype), w.astype(conv_dtype), (1, 1), "SAME",
            dimension_numbers=dn, preferred_element_type=jnp.float32)

    def bn(y, g, b, m, v):
        return (y - m) / jnp.sqrt(v + eps) * g + b

    y = jnp.maximum(bn(conv(x, w1), g1, be1, m1, v1), 0.0)
    y = bn(conv(y, w2), g2, be2, m2, v2)
    pooled = y.mean(axis=(1, 2))                               # (B, C)
    hid = jnp.maximum(pooled @ fc1w.T + fc1b, 0.0)
    gate = jax.nn.sigmoid(hid @ fc2w.T + fc2b)                 # (B, C)
    y = y * gate[:, None, None, :]
    return jnp.maximum(y + x, 0.0)


# ---------------------------------------------------------------------------
if __name__ == "__main__":
    key = jax.random.PRNGKey(0)
    kx, kp = jax.random.split(key)

    # NHWC (8, 8, 8, 32)  ==  PyTorch NCHW (8, 32, 8, 8); W*C = 256 lanes.
    B, H, W, C = 8, 8, 8, FILTER_CHANNEL
    x = jax.random.normal(kx, (B, H, W, C), jnp.float32)
    raw = make_raw_params(kp)

    params = prepare_params(raw, H, W, conv_dtype=jnp.bfloat16)
    out = jax.block_until_ready(jax.jit(residual_block_nhwc)(x, params))

    # Reference mirrors the kernel's bf16 rounding of conv inputs/weights
    # (f32 accumulation), so agreement is tight despite bf16 compute.
    ref = reference_nhwc(x, raw, conv_dtype=jnp.bfloat16)
    assert out.shape == (B, H, W, C)
    err = float(jnp.max(jnp.abs(out - ref)))
    assert jnp.allclose(out, ref, atol=1e-2, rtol=1e-2), f"max abs err {err}"

    print("KERNEL_OK")
</pallas_src>

<mosaic_0001>
module attributes {stable_mosaic.version = 11 : i64} {
  func.func @_residual_block_kernel(%arg0: i32, %arg1: memref<8x8x256xf32, #tpu.memory_space<vmem>>, %arg2: memref<3x256x256xbf16, #tpu.memory_space<vmem>>, %arg3: memref<1x256xf32, #tpu.memory_space<vmem>>, %arg4: memref<1x256xf32, #tpu.memory_space<vmem>>, %arg5: memref<3x256x256xbf16, #tpu.memory_space<vmem>>, %arg6: memref<1x256xf32, #tpu.memory_space<vmem>>, %arg7: memref<1x256xf32, #tpu.memory_space<vmem>>, %arg8: memref<256x8xf32, #tpu.memory_space<vmem>>, %arg9: memref<1x8xf32, #tpu.memory_space<vmem>>, %arg10: memref<8x256xf32, #tpu.memory_space<vmem>>, %arg11: memref<1x256xf32, #tpu.memory_space<vmem>>, %arg12: memref<8x8x256xf32, #tpu.memory_space<vmem>>) attributes {dimension_semantics = [#tpu.dimension_semantics<parallel>], iteration_bounds = array<i64: 1>, scalar_prefetch = 0 : i64, scratch_operands = 0 : i64, tpu.core_type = #tpu.core_type<tc>, window_params = [{transform_indices = @transform_0, window_bounds = array<i64: 8, 8, 256>}, {pipeline_mode = #tpu.pipeline_mode<synchronous>, transform_indices = @transform_1, window_bounds = array<i64: 3, 256, 256>}, {pipeline_mode = #tpu.pipeline_mode<synchronous>, transform_indices = @transform_2, window_bounds = array<i64: 1, 256>}, {pipeline_mode = #tpu.pipeline_mode<synchronous>, transform_indices = @transform_3, window_bounds = array<i64: 1, 256>}, {pipeline_mode = #tpu.pipeline_mode<synchronous>, transform_indices = @transform_4, window_bounds = array<i64: 3, 256, 256>}, {pipeline_mode = #tpu.pipeline_mode<synchronous>, transform_indices = @transform_5, window_bounds = array<i64: 1, 256>}, {pipeline_mode = #tpu.pipeline_mode<synchronous>, transform_indices = @transform_6, window_bounds = array<i64: 1, 256>}, {pipeline_mode = #tpu.pipeline_mode<synchronous>, transform_indices = @transform_7, window_bounds = array<i64: 256, 8>}, {pipeline_mode = #tpu.pipeline_mode<synchronous>, transform_indices = @transform_8, window_bounds = array<i64: 1, 8>}, {pipeline_mode = #tpu.pipeline_mode<synchronous>, transform_indices = @transform_9, window_bounds = array<i64: 8, 256>}, {pipeline_mode = #tpu.pipeline_mode<synchronous>, transform_indices = @transform_10, window_bounds = array<i64: 1, 256>}, {transform_indices = @transform_11, window_bounds = array<i64: 8, 8, 256>}]} {
    %c0 = arith.constant 0 : index
    %c0_0 = arith.constant 0 : index
    %c0_1 = arith.constant 0 : index
    %0 = vector.load %arg1[%c0, %c0_0, %c0_1] : memref<8x8x256xf32, #tpu.memory_space<vmem>>, vector<8x8x256xf32>
    %cst = arith.constant 0.000000e+00 : f32
    %1 = vector.broadcast %cst : f32 to vector<8x1x256xf32>
    %2 = vector.extract_strided_slice %0 {offsets = [0, 0, 0], sizes = [8, 7, 256], strides = [1, 1, 1]} : vector<8x8x256xf32> to vector<8x7x256xf32>
    %3 = tpu.concatenate %1, %2 in 1 : vector<8x1x256xf32>, vector<8x7x256xf32> -> vector<8x8x256xf32>
    %4 = vector.extract_strided_slice %0 {offsets = [0, 1, 0], sizes = [8, 7, 256], strides = [1, 1, 1]} : vector<8x8x256xf32> to vector<8x7x256xf32>
    %5 = tpu.concatenate %4, %1 in 1 : vector<8x7x256xf32>, vector<8x1x256xf32> -> vector<8x8x256xf32>
    %6 = arith.truncf %3 : vector<8x8x256xf32> to vector<8x8x256xbf16>
    %7 = vector.shape_cast %6 : vector<8x8x256xbf16> to vector<64x256xbf16>
    %c0_2 = arith.constant 0 : index
    %c0_3 = arith.constant 0 : index
    %c0_4 = arith.constant 0 : index
    %8 = vector.load %arg2[%c0_2, %c0_3, %c0_4] : memref<3x256x256xbf16, #tpu.memory_space<vmem>>, vector<1x256x256xbf16>
    %9 = vector.shape_cast %8 : vector<1x256x256xbf16> to vector<256x256xbf16>
    %cst_5 = arith.constant dense<0.000000e+00> : vector<64x256xf32>
    %10 = tpu.matmul %7, %9, %cst_5 {dimension_numbers = #tpu.dot_dimension_numbers<[1], [0], [0], [1], [0, 0, 1, 1], [], []>} : vector<64x256xbf16>, vector<256x256xbf16>, vector<64x256xf32> -> vector<64x256xf32>
    %11 = arith.truncf %0 : vector<8x8x256xf32> to vector<8x8x256xbf16>
    %12 = vector.shape_cast %11 : vector<8x8x256xbf16> to vector<64x256xbf16>
    %c1 = arith.constant 1 : index
    %c0_6 = arith.constant 0 : index
    %c0_7 = arith.constant 0 : index
    %13 = vector.load %arg2[%c1, %c0_6, %c0_7] : memref<3x256x256xbf16, #tpu.memory_space<vmem>>, vector<1x256x256xbf16>
    %14 = vector.shape_cast %13 : vector<1x256x256xbf16> to vector<256x256xbf16>
    %cst_8 = arith.constant dense<0.000000e+00> : vector<64x256xf32>
    %15 = tpu.matmul %12, %14, %cst_8 {dimension_numbers = #tpu.dot_dimension_numbers<[1], [0], [0], [1], [0, 0, 1, 1], [], []>} : vector<64x256xbf16>, vector<256x256xbf16>, vector<64x256xf32> -> vector<64x256xf32>
    %16 = arith.addf %10, %15 : vector<64x256xf32>
    %17 = arith.truncf %5 : vector<8x8x256xf32> to vector<8x8x256xbf16>
    %18 = vector.shape_cast %17 : vector<8x8x256xbf16> to vector<64x256xbf16>
    %c2 = arith.constant 2 : index
    %c0_9 = arith.constant 0 : index
    %c0_10 = arith.constant 0 : index
    %19 = vector.load %arg2[%c2, %c0_9, %c0_10] : memref<3x256x256xbf16, #tpu.memory_space<vmem>>, vector<1x256x256xbf16>
    %20 = vector.shape_cast %19 : vector<1x256x256xbf16> to vector<256x256xbf16>
    %cst_11 = arith.constant dense<0.000000e+00> : vector<64x256xf32>
    %21 = tpu.matmul %18, %20, %cst_11 {dimension_numbers = #tpu.dot_dimension_numbers<[1], [0], [0], [1], [0, 0, 1, 1], [], []>} : vector<64x256xbf16>, vector<256x256xbf16>, vector<64x256xf32> -> vector<64x256xf32>
    %22 = arith.addf %16, %21 : vector<64x256xf32>
    %23 = vector.shape_cast %22 : vector<64x256xf32> to vector<8x8x256xf32>
    %c0_12 = arith.constant 0 : index
    %c0_13 = arith.constant 0 : index
    %24 = vector.load %arg3[%c0_12, %c0_13] : memref<1x256xf32, #tpu.memory_space<vmem>>, vector<1x256xf32>
    %25 = vector.shape_cast %24 : vector<1x256xf32> to vector<1x1x256xf32>
    %26 = vector.broadcast %25 : vector<1x1x256xf32> to vector<8x8x256xf32>
    %27 = arith.mulf %23, %26 : vector<8x8x256xf32>
    %c0_14 = arith.constant 0 : index
    %c0_15 = arith.constant 0 : index
    %28 = vector.load %arg4[%c0_14, %c0_15] : memref<1x256xf32, #tpu.memory_space<vmem>>, vector<1x256xf32>
    %29 = vector.shape_cast %28 : vector<1x256xf32> to vector<1x1x256xf32>
    %30 = vector.broadcast %29 : vector<1x1x256xf32> to vector<8x8x256xf32>
    %31 = arith.addf %27, %30 : vector<8x8x256xf32>
    %cst_16 = arith.constant 0.000000e+00 : f32
    %32 = vector.broadcast %cst_16 : f32 to vector<8x8x256xf32>
    %33 = arith.maximumf %31, %32 : vector<8x8x256xf32>
    %cst_17 = arith.constant 0.000000e+00 : f32
    %34 = vector.broadcast %cst_17 : f32 to vector<8x1x256xf32>
    %35 = vector.extract_strided_slice %33 {offsets = [0, 0, 0], sizes = [8, 7, 256], strides = [1, 1, 1]} : vector<8x8x256xf32> to vector<8x7x256xf32>
    %36 = tpu.concatenate %34, %35 in 1 : vector<8x1x256xf32>, vector<8x7x256xf32> -> vector<8x8x256xf32>
    %37 = vector.extract_strided_slice %33 {offsets = [0, 1, 0], sizes = [8, 7, 256], strides = [1, 1, 1]} : vector<8x8x256xf32> to vector<8x7x256xf32>
    %38 = tpu.concatenate %37, %34 in 1 : vector<8x7x256xf32>, vector<8x1x256xf32> -> vector<8x8x256xf32>
    %39 = arith.truncf %36 : vector<8x8x256xf32> to vector<8x8x256xbf16>
    %40 = vector.shape_cast %39 : vector<8x8x256xbf16> to vector<64x256xbf16>
    %c0_18 = arith.constant 0 : index
    %c0_19 = arith.constant 0 : index
    %c0_20 = arith.constant 0 : index
    %41 = vector.load %arg5[%c0_18, %c0_19, %c0_20] : memref<3x256x256xbf16, #tpu.memory_space<vmem>>, vector<1x256x256xbf16>
    %42 = vector.shape_cast %41 : vector<1x256x256xbf16> to vector<256x256xbf16>
    %cst_21 = arith.constant dense<0.000000e+00> : vector<64x256xf32>
    %43 = tpu.matmul %40, %42, %cst_21 {dimension_numbers = #tpu.dot_dimension_numbers<[1], [0], [0], [1], [0, 0, 1, 1], [], []>} : vector<64x256xbf16>, vector<256x256xbf16>, vector<64x256xf32> -> vector<64x256xf32>
    %44 = arith.truncf %33 : vector<8x8x256xf32> to vector<8x8x256xbf16>
    %45 = vector.shape_cast %44 : vector<8x8x256xbf16> to vector<64x256xbf16>
    %c1_22 = arith.constant 1 : index
    %c0_23 = arith.constant 0 : index
    %c0_24 = arith.constant 0 : index
    %46 = vector.load %arg5[%c1_22, %c0_23, %c0_24] : memref<3x256x256xbf16, #tpu.memory_space<vmem>>, vector<1x256x256xbf16>
    %47 = vector.shape_cast %46 : vector<1x256x256xbf16> to vector<256x256xbf16>
    %cst_25 = arith.constant dense<0.000000e+00> : vector<64x256xf32>
    %48 = tpu.matmul %45, %47, %cst_25 {dimension_numbers = #tpu.dot_dimension_numbers<[1], [0], [0], [1], [0, 0, 1, 1], [], []>} : vector<64x256xbf16>, vector<256x256xbf16>, vector<64x256xf32> -> vector<64x256xf32>
    %49 = arith.addf %43, %48 : vector<64x256xf32>
    %50 = arith.truncf %38 : vector<8x8x256xf32> to vector<8x8x256xbf16>
    %51 = vector.shape_cast %50 : vector<8x8x256xbf16> to vector<64x256xbf16>
    %c2_26 = arith.constant 2 : index
    %c0_27 = arith.constant 0 : index
    %c0_28 = arith.constant 0 : index
    %52 = vector.load %arg5[%c2_26, %c0_27, %c0_28] : memref<3x256x256xbf16, #tpu.memory_space<vmem>>, vector<1x256x256xbf16>
    %53 = vector.shape_cast %52 : vector<1x256x256xbf16> to vector<256x256xbf16>
    %cst_29 = arith.constant dense<0.000000e+00> : vector<64x256xf32>
    %54 = tpu.matmul %51, %53, %cst_29 {dimension_numbers = #tpu.dot_dimension_numbers<[1], [0], [0], [1], [0, 0, 1, 1], [], []>} : vector<64x256xbf16>, vector<256x256xbf16>, vector<64x256xf32> -> vector<64x256xf32>
    %55 = arith.addf %49, %54 : vector<64x256xf32>
    %56 = vector.shape_cast %55 : vector<64x256xf32> to vector<8x8x256xf32>
    %c0_30 = arith.constant 0 : index
    %c0_31 = arith.constant 0 : index
    %57 = vector.load %arg6[%c0_30, %c0_31] : memref<1x256xf32, #tpu.memory_space<vmem>>, vector<1x256xf32>
    %58 = vector.shape_cast %57 : vector<1x256xf32> to vector<1x1x256xf32>
    %59 = vector.broadcast %58 : vector<1x1x256xf32> to vector<8x8x256xf32>
    %60 = arith.mulf %56, %59 : vector<8x8x256xf32>
    %c0_32 = arith.constant 0 : index
    %c0_33 = arith.constant 0 : index
    %61 = vector.load %arg7[%c0_32, %c0_33] : memref<1x256xf32, #tpu.memory_space<vmem>>, vector<1x256xf32>
    %62 = vector.shape_cast %61 : vector<1x256xf32> to vector<1x1x256xf32>
    %63 = vector.broadcast %62 : vector<1x1x256xf32> to vector<8x8x256xf32>
    %64 = arith.addf %60, %63 : vector<8x8x256xf32>
    %cst_34 = arith.constant dense<0.000000e+00> : vector<8x256xf32>
    %65 = vector.multi_reduction <add>, %64, %cst_34 [1] : vector<8x8x256xf32> to vector<8x256xf32>
    %c0_35 = arith.constant 0 : index
    %c0_36 = arith.constant 0 : index
    %66 = vector.load %arg8[%c0_35, %c0_36] : memref<256x8xf32, #tpu.memory_space<vmem>>, vector<256x8xf32>
    %cst_37 = arith.constant dense<0.000000e+00> : vector<8x8xf32>
    %67 = tpu.matmul %65, %66, %cst_37 {dimension_numbers = #tpu.dot_dimension_numbers<[1], [0], [0], [1], [0, 0, 1, 1], [], []>} : vector<8x256xf32>, vector<256x8xf32>, vector<8x8xf32> -> vector<8x8xf32>
    %c0_38 = arith.constant 0 : index
    %c0_39 = arith.constant 0 : index
    %68 = vector.load %arg9[%c0_38, %c0_39] : memref<1x8xf32, #tpu.memory_space<vmem>>, vector<1x8xf32>
    %69 = vector.broadcast %68 : vector<1x8xf32> to vector<8x8xf32>
    %70 = arith.addf %67, %69 : vector<8x8xf32>
    %cst_40 = arith.constant 0.000000e+00 : f32
    %71 = vector.broadcast %cst_40 : f32 to vector<8x8xf32>
    %72 = arith.maximumf %70, %71 : vector<8x8xf32>
    %c0_41 = arith.constant 0 : index
    %c0_42 = arith.constant 0 : index
    %73 = vector.load %arg10[%c0_41, %c0_42] : memref<8x256xf32, #tpu.memory_space<vmem>>, vector<8x256xf32>
    %cst_43 = arith.constant dense<0.000000e+00> : vector<8x256xf32>
    %74 = tpu.matmul %72, %73, %cst_43 {dimension_numbers = #tpu.dot_dimension_numbers<[1], [0], [0], [1], [0, 0, 1, 1], [], []>} : vector<8x8xf32>, vector<8x256xf32>, vector<8x256xf32> -> vector<8x256xf32>
    %c0_44 = arith.constant 0 : index
    %c0_45 = arith.constant 0 : index
    %75 = vector.load %arg11[%c0_44, %c0_45] : memref<1x256xf32, #tpu.memory_space<vmem>>, vector<1x256xf32>
    %76 = vector.broadcast %75 : vector<1x256xf32> to vector<8x256xf32>
    %77 = arith.addf %74, %76 : vector<8x256xf32>
    %cst_46 = arith.constant 0.000000e+00 : f32
    %78 = vector.broadcast %cst_46 : f32 to vector<8x256xf32>
    %79 = arith.subf %78, %77 : vector<8x256xf32>
    %80 = math.exp %79 : vector<8x256xf32>
    %cst_47 = arith.constant 1.000000e+00 : f32
    %81 = vector.broadcast %cst_47 : f32 to vector<8x256xf32>
    %82 = arith.addf %81, %80 : vector<8x256xf32>
    %cst_48 = arith.constant 1.000000e+00 : f32
    %83 = vector.broadcast %cst_48 : f32 to vector<8x256xf32>
    %84 = arith.divf %83, %82 : vector<8x256xf32>
    %85 = vector.shape_cast %84 : vector<8x256xf32> to vector<8x1x256xf32>
    %86 = vector.broadcast %85 : vector<8x1x256xf32> to vector<8x8x256xf32>
    %87 = arith.mulf %64, %86 : vector<8x8x256xf32>
    %88 = arith.addf %87, %0 : vector<8x8x256xf32>
    %cst_49 = arith.constant 0.000000e+00 : f32
    %89 = vector.broadcast %cst_49 : f32 to vector<8x8x256xf32>
    %90 = arith.maximumf %88, %89 : vector<8x8x256xf32>
    %c0_50 = arith.constant 0 : index
    %c0_51 = arith.constant 0 : index
    %c0_52 = arith.constant 0 : index
    %91 = vector.load %arg12[%c0_50, %c0_51, %c0_52] : memref<8x8x256xf32, #tpu.memory_space<vmem>>, vector<8x8x256xf32>
    tpu.vector_store %arg12[%c0_50, %c0_51, %c0_52], %90 {strides = array<i32>} : memref<8x8x256xf32, #tpu.memory_space<vmem>>, vector<8x8x256xf32>,
    return
  }
  func.func @transform_0(%arg0: i32) -> (i32, i32, i32) {
    %c0_i32 = arith.constant 0 : i32
    %c0_i32_0 = arith.constant 0 : i32
    %c0_i32_1 = arith.constant 0 : i32
    return %arg0, %c0_i32, %c0_i32_0 : i32, i32, i32
  }
  func.func @transform_1(%arg0: i32) -> (i32, i32, i32) {
    %c0_i32 = arith.constant 0 : i32
    %c0_i32_0 = arith.constant 0 : i32
    %c0_i32_1 = arith.constant 0 : i32
    %c0_i32_2 = arith.constant 0 : i32
    return %c0_i32, %c0_i32_0, %c0_i32_1 : i32, i32, i32
  }
  func.func @transform_2(%arg0: i32) -> (i32, i32) {
    %c0_i32 = arith.constant 0 : i32
    %c0_i32_0 = arith.constant 0 : i32
    %c0_i32_1 = arith.constant 0 : i32
    return %c0_i32, %c0_i32_0 : i32, i32
  }
  func.func @transform_3(%arg0: i32) -> (i32, i32) {
    %c0_i32 = arith.constant 0 : i32
    %c0_i32_0 = arith.constant 0 : i32
    %c0_i32_1 = arith.constant 0 : i32
    return %c0_i32, %c0_i32_0 : i32, i32
  }
  func.func @transform_4(%arg0: i32) -> (i32, i32, i32) {
    %c0_i32 = arith.constant 0 : i32
    %c0_i32_0 = arith.constant 0 : i32
    %c0_i32_1 = arith.constant 0 : i32
    %c0_i32_2 = arith.constant 0 : i32
    return %c0_i32, %c0_i32_0, %c0_i32_1 : i32, i32, i32
  }
  func.func @transform_5(%arg0: i32) -> (i32, i32) {
    %c0_i32 = arith.constant 0 : i32
    %c0_i32_0 = arith.constant 0 : i32
    %c0_i32_1 = arith.constant 0 : i32
    return %c0_i32, %c0_i32_0 : i32, i32
  }
  func.func @transform_6(%arg0: i32) -> (i32, i32) {
    %c0_i32 = arith.constant 0 : i32
    %c0_i32_0 = arith.constant 0 : i32
    %c0_i32_1 = arith.constant 0 : i32
    return %c0_i32, %c0_i32_0 : i32, i32
  }
  func.func @transform_7(%arg0: i32) -> (i32, i32) {
    %c0_i32 = arith.constant 0 : i32
    %c0_i32_0 = arith.constant 0 : i32
    %c0_i32_1 = arith.constant 0 : i32
    return %c0_i32, %c0_i32_0 : i32, i32
  }
  func.func @transform_8(%arg0: i32) -> (i32, i32) {
    %c0_i32 = arith.constant 0 : i32
    %c0_i32_0 = arith.constant 0 : i32
    %c0_i32_1 = arith.constant 0 : i32
    return %c0_i32, %c0_i32_0 : i32, i32
  }
  func.func @transform_9(%arg0: i32) -> (i32, i32) {
    %c0_i32 = arith.constant 0 : i32
    %c0_i32_0 = arith.constant 0 : i32
    %c0_i32_1 = arith.constant 0 : i32
    return %c0_i32, %c0_i32_0 : i32, i32
  }
  func.func @transform_10(%arg0: i32) -> (i32, i32) {
    %c0_i32 = arith.constant 0 : i32
    %c0_i32_0 = arith.constant 0 : i32
    %c0_i32_1 = arith.constant 0 : i32
    return %c0_i32, %c0_i32_0 : i32, i32
  }
  func.func @transform_11(%arg0: i32) -> (i32, i32, i32) {
    %c0_i32 = arith.constant 0 : i32
    %c0_i32_0 = arith.constant 0 : i32
    %c0_i32_1 = arith.constant 0 : i32
    return %arg0, %c0_i32, %c0_i32_0 : i32, i32, i32
  }
}

</mosaic_0001>

<llo_original>
// kernel: residual_block_nhwc.1
$region0: #{residual_block_nhwc.1}
  #allocation0 [shape = 'u32[]', space=smem, size = 0x4, offset = 0x4, fixed_abs, tag = 'smem constant byte address 0x4 - core index']
  #allocation1 [shape = 'u32[144,128]{1,0:T(1,128)}', space=vmem, size = 0x12000, scoped, tag = 'internal scratch']
  %s0 = inlined_call_operand.vmem [shape: f32[8,8,256], index: 0, kind: input, shape index: {}]
  %s1 = inlined_call_operand.vmem [shape: bf16[3,256,256], index: 1, kind: input, shape index: {}]
  %s2 = inlined_call_operand.vmem [shape: f32[1,256], index: 2, kind: input, shape index: {}]
  %s3 = inlined_call_operand.vmem [shape: f32[1,256], index: 3, kind: input, shape index: {}]
  %s4 = inlined_call_operand.hbm [shape: bf16[3,256,256], index: 4, kind: input, shape index: {}]
  %s5 = inlined_call_operand.vmem [shape: f32[1,256], index: 5, kind: input, shape index: {}]
  %s6 = inlined_call_operand.vmem [shape: f32[1,256], index: 6, kind: input, shape index: {}]
  %s7 = inlined_call_operand.vmem [shape: f32[256,8], index: 7, kind: input, shape index: {}]
  %s8 = inlined_call_operand.vmem [shape: f32[1,8], index: 8, kind: input, shape index: {}]
  %s9 = inlined_call_operand.vmem [shape: f32[8,256], index: 9, kind: input, shape index: {}]
  %s10 = inlined_call_operand.vmem [shape: f32[1,256], index: 10, kind: input, shape index: {}]
  %s11 = inlined_call_operand.vmem [shape: f32[8,8,256], index: 11, kind: output, shape index: {}]
  %s12 = sld [smem:[#allocation0]]
  $region58: #{residual_block_nhwc.1} parent=0
    _
  %s14 = ssub.s32 1, %s12
  %s15 = scalar_select 0, %s14, %s12
  $region1: #{residual_block_nhwc.1} parent=0
    #allocation2 [shape = 'u8[393216]{0}', space=vmem, size = 0x60000, scoped, tag = 'input window, operand 4, single buffered']
    #allocation3 [shape = 's32[1]{0}', space=sflag, size = 0x4, scoped, tag = 'scoped memory for residual_block_nhwc.1']
    %16 = vsyncpa [#allocation3], 0
    // Predicated region
    $region2: #{residual_block_nhwc.1} parent=1 // pred_check
      _
    $region3: #{residual_block_nhwc.1} parent=1 // pred_check_branch
      %18 = sbr.rel (0) target = $region5
    $region4: #{residual_block_nhwc.1} parent=1 // pred_region
      _
    $region5: #{residual_block_nhwc.1} parent=1 // pred_fallthru
      _
    // Predicated region
    $region6: #{residual_block_nhwc.1} parent=1 // pred_check
      _
    $region7: #{residual_block_nhwc.1} parent=1 // pred_check_branch
      %20 = sbr.rel (0) target = $region9
    $region8: #{residual_block_nhwc.1} parent=1 // pred_region
      _
    $region9: #{residual_block_nhwc.1} parent=1 // pred_fallthru
      _
    // Predicated region
    $region10: #{residual_block_nhwc.1} parent=1 // pred_check
      _
    $region11: #{residual_block_nhwc.1} parent=1 // pred_check_branch
      %22 = sbr.rel (0) target = $region13
    $region12: #{residual_block_nhwc.1} parent=1 // pred_region
      _
    $region13: #{residual_block_nhwc.1} parent=1 // pred_fallthru
      _
    // Predicated region
    $region14: #{residual_block_nhwc.1} parent=1 // pred_check
      _
    $region15: #{residual_block_nhwc.1} parent=1 // pred_check_branch
      %24 = sbr.rel (0) target = $region17
    $region16: #{residual_block_nhwc.1} parent=1 // pred_region
      _
    $region17: #{residual_block_nhwc.1} parent=1 // pred_fallthru
      _
    // Predicated region
    $region18: #{residual_block_nhwc.1} parent=1 // pred_check
      _
    $region19: #{residual_block_nhwc.1} parent=1 // pred_check_branch
      %26 = sbr.rel (0) target = $region21
    $region20: #{residual_block_nhwc.1} parent=1 // pred_region
      %s28 = ssub.s32 12288, 12288
      %29 = vsyncadd [#allocation3], %s28
      %s30 = sshll.u32 [#allocation2], 4
      %s31 = int_to_ptr.vmem [resolvable:$true] %s30
      %36 = dma.hbm_to_vmem [thread:$0]  %s4, 12288, %s31, [#allocation3], 128, 128, 8
    $region21: #{residual_block_nhwc.1} parent=1 // pred_fallthru
      _
    // Predicated region
    $region22: #{residual_block_nhwc.1} parent=1 // pred_check
      _
    $region23: #{residual_block_nhwc.1} parent=1 // pred_check_branch
      %38 = sbr.rel (0) target = $region25
    $region24: #{residual_block_nhwc.1} parent=1 // pred_region
      _
    $region25: #{residual_block_nhwc.1} parent=1 // pred_fallthru
      _
    // Predicated region
    $region26: #{residual_block_nhwc.1} parent=1 // pred_check
      _
    $region27: #{residual_block_nhwc.1} parent=1 // pred_check_branch
      %40 = sbr.rel (0) target = $region29
    $region28: #{residual_block_nhwc.1} parent=1 // pred_region
      _
    $region29: #{residual_block_nhwc.1} parent=1 // pred_fallthru
      _
    // Predicated region
    $region30: #{residual_block_nhwc.1} parent=1 // pred_check
      _
    $region31: #{residual_block_nhwc.1} parent=1 // pred_check_branch
      %42 = sbr.rel (0) target = $region33
    $region32: #{residual_block_nhwc.1} parent=1 // pred_region
      _
    $region33: #{residual_block_nhwc.1} parent=1 // pred_fallthru
      _
    // Predicated region
    $region34: #{residual_block_nhwc.1} parent=1 // pred_check
      _
    $region35: #{residual_block_nhwc.1} parent=1 // pred_check_branch
      %44 = sbr.rel (0) target = $region37
    $region36: #{residual_block_nhwc.1} parent=1 // pred_region
      _
    $region37: #{residual_block_nhwc.1} parent=1 // pred_fallthru
      _
    // Predicated region
    $region38: #{residual_block_nhwc.1} parent=1 // pred_check
      _
    $region39: #{residual_block_nhwc.1} parent=1 // pred_check_branch
      %46 = sbr.rel (0) target = $region41
    $region40: #{residual_block_nhwc.1} parent=1 // pred_region
      _
    $region41: #{residual_block_nhwc.1} parent=1 // pred_fallthru
      _
    // Predicated region
    $region42: #{residual_block_nhwc.1} parent=1 // pred_check
      _
    $region43: #{residual_block_nhwc.1} parent=1 // pred_check_branch
      %48 = sbr.rel (0) target = $region45
    $region44: #{residual_block_nhwc.1} parent=1 // pred_region
      _
    $region45: #{residual_block_nhwc.1} parent=1 // pred_fallthru
      _
    // Predicated region
    $region46: #{residual_block_nhwc.1} parent=1 // pred_check
      _
    $region47: #{residual_block_nhwc.1} parent=1 // pred_check_branch
      %50 = sbr.rel (0) target = $region49
    $region48: #{residual_block_nhwc.1} parent=1 // pred_region
      %51 = dma.done [#allocation3], 12288
    $region49: #{residual_block_nhwc.1} parent=1 // pred_fallthru
      _
    %v52 = vld [vmem:[%s0] sm:$0xff]
    %v53 = vld [vmem:[%s0 + $0x8] sm:$0xff]
    %v54 = vld [vmem:[%s0 + $0x10] sm:$0xff]
    %v55 = vld [vmem:[%s0 + $0x18] sm:$0xff]
    %v56 = vld [vmem:[%s0 + $0x20] sm:$0xff]
    %v57 = vld [vmem:[%s0 + $0x28] sm:$0xff]
    %v58 = vld [vmem:[%s0 + $0x30] sm:$0xff]
    %v59 = vld [vmem:[%s0 + $0x38] sm:$0xff]
    %v60 = vld [vmem:[%s0 + $0x40] sm:$0xff]
    %v61 = vld [vmem:[%s0 + $0x48] sm:$0xff]
    %v62 = vld [vmem:[%s0 + $0x50] sm:$0xff]
    %v63 = vld [vmem:[%s0 + $0x58] sm:$0xff]
    %v64 = vld [vmem:[%s0 + $0x60] sm:$0xff]
    %v65 = vld [vmem:[%s0 + $0x68] sm:$0xff]
    %v66 = vld [vmem:[%s0 + $0x70] sm:$0xff]
    %v67 = vld [vmem:[%s0 + $0x78] sm:$0xff]
    %v84 = vrot.slane %v52, 7
    %v85 = vrot.slane %v53, 7
    %v86 = vrot.slane %v54, 7
    %v87 = vrot.slane %v55, 7
    %v88 = vrot.slane %v56, 7
    %v89 = vrot.slane %v57, 7
    %v90 = vrot.slane %v58, 7
    %v91 = vrot.slane %v59, 7
    %v92 = vrot.slane %v60, 7
    %v93 = vrot.slane %v61, 7
    %v94 = vrot.slane %v62, 7
    %v95 = vrot.slane %v63, 7
    %v96 = vrot.slane %v64, 7
    %v97 = vrot.slane %v65, 7
    %v98 = vrot.slane %v66, 7
    %v99 = vrot.slane %v67, 7
    %vm116 = vcmask 1040384
    %v117 = vsel %vm116, 0.0, %v84
    %v118 = vsel %vm116, 0.0, %v85
    %v119 = vsel %vm116, 0.0, %v86
    %v120 = vsel %vm116, 0.0, %v87
    %v121 = vsel %vm116, 0.0, %v88
    %v122 = vsel %vm116, 0.0, %v89
    %v123 = vsel %vm116, 0.0, %v90
    %v124 = vsel %vm116, 0.0, %v91
    %v125 = vsel %vm116, 0.0, %v92
    %v126 = vsel %vm116, 0.0, %v93
    %v127 = vsel %vm116, 0.0, %v94
    %v128 = vsel %vm116, 0.0, %v95
    %v129 = vsel %vm116, 0.0, %v96
    %v130 = vsel %vm116, 0.0, %v97
    %v131 = vsel %vm116, 0.0, %v98
    %v132 = vsel %vm116, 0.0, %v99
    %v133 = vrot.slane %v52, 1
    %v134 = vrot.slane %v53, 1
    %v135 = vrot.slane %v54, 1
    %v136 = vrot.slane %v55, 1
    %v137 = vrot.slane %v56, 1
    %v138 = vrot.slane %v57, 1
    %v139 = vrot.slane %v58, 1
    %v140 = vrot.slane %v59, 1
    %v141 = vrot.slane %v60, 1
    %v142 = vrot.slane %v61, 1
    %v143 = vrot.slane %v62, 1
    %v144 = vrot.slane %v63, 1
    %v145 = vrot.slane %v64, 1
    %v146 = vrot.slane %v65, 1
    %v147 = vrot.slane %v66, 1
    %v148 = vrot.slane %v67, 1
    %vm165 = vcmask 1046528
    %v166 = vsel %vm165, %v133, 0.0
    %v167 = vsel %vm165, %v134, 0.0
    %v168 = vsel %vm165, %v135, 0.0
    %v169 = vsel %vm165, %v136, 0.0
    %v170 = vsel %vm165, %v137, 0.0
    %v171 = vsel %vm165, %v138, 0.0
    %v172 = vsel %vm165, %v139, 0.0
    %v173 = vsel %vm165, %v140, 0.0
    %v174 = vsel %vm165, %v141, 0.0
    %v175 = vsel %vm165, %v142, 0.0
    %v176 = vsel %vm165, %v143, 0.0
    %v177 = vsel %vm165, %v144, 0.0
    %v178 = vsel %vm165, %v145, 0.0
    %v179 = vsel %vm165, %v146, 0.0
    %v180 = vsel %vm165, %v147, 0.0
    %v181 = vsel %vm165, %v148, 0.0
    %v182 = vpack.c.bf16 %v117, %v117
    %v183 = vpack.c.bf16 %v118, %v118
    %v184 = vpack.c.bf16 %v119, %v119
    %v185 = vpack.c.bf16 %v120, %v120
    %v186 = vpack.c.bf16 %v121, %v121
    %v187 = vpack.c.bf16 %v122, %v122
    %v188 = vpack.c.bf16 %v123, %v123
    %v189 = vpack.c.bf16 %v124, %v124
    %v190 = vpack.c.bf16 %v125, %v125
    %v191 = vpack.c.bf16 %v126, %v126
    %v192 = vpack.c.bf16 %v127, %v127
    %v193 = vpack.c.bf16 %v128, %v128
    %v194 = vpack.c.bf16 %v129, %v129
    %v195 = vpack.c.bf16 %v130, %v130
    %v196 = vpack.c.bf16 %v131, %v131
    %v197 = vpack.c.bf16 %v132, %v132
    %v214 = vunpack.c.l.b16 %v182
    %v215 = vunpack.c.l.b16 %v183
    %v216 = vunpack.c.l.b16 %v184
    %v217 = vunpack.c.l.b16 %v185
    %v218 = vunpack.c.l.b16 %v186
    %v219 = vunpack.c.l.b16 %v187
    %v220 = vunpack.c.l.b16 %v188
    %v221 = vunpack.c.l.b16 %v189
    %v222 = vunpack.c.l.b16 %v190
    %v223 = vunpack.c.l.b16 %v191
    %v224 = vunpack.c.l.b16 %v192
    %v225 = vunpack.c.l.b16 %v193
    %v226 = vunpack.c.l.b16 %v194
    %v227 = vunpack.c.l.b16 %v195
    %v228 = vunpack.c.l.b16 %v196
    %v229 = vunpack.c.l.b16 %v197
    %v230 = vld [vmem:[%s1] sm:$0xff]
    %v231 = vld [vmem:[%s1 + $0x8] sm:$0xff]
    %v232 = vld [vmem:[%s1 + $0x10] sm:$0xff]
    %v233 = vld [vmem:[%s1 + $0x18] sm:$0xff]
    %v234 = vld [vmem:[%s1 + $0x20] sm:$0xff]
    %v235 = vld [vmem:[%s1 + $0x28] sm:$0xff]
    %v236 = vld [vmem:[%s1 + $0x30] sm:$0xff]
    %v237 = vld [vmem:[%s1 + $0x38] sm:$0xff]
    %v238 = vld [vmem:[%s1 + $0x40] sm:$0xff]
    %v239 = vld [vmem:[%s1 + $0x48] sm:$0xff]
    %v240 = vld [vmem:[%s1 + $0x50] sm:$0xff]
    %v241 = vld [vmem:[%s1 + $0x58] sm:$0xff]
    %v242 = vld [vmem:[%s1 + $0x60] sm:$0xff]
    %v243 = vld [vmem:[%s1 + $0x68] sm:$0xff]
    %v244 = vld [vmem:[%s1 + $0x70] sm:$0xff]
    %v245 = vld [vmem:[%s1 + $0x78] sm:$0xff]
    %v246 = vld [vmem:[%s1 + $0x80] sm:$0xff]
    %v247 = vld [vmem:[%s1 + $0x88] sm:$0xff]
    %v248 = vld [vmem:[%s1 + $0x90] sm:$0xff]
    %v249 = vld [vmem:[%s1 + $0x98] sm:$0xff]
    %v250 = vld [vmem:[%s1 + $0xa0] sm:$0xff]
    %v251 = vld [vmem:[%s1 + $0xa8] sm:$0xff]
    %v252 = vld [vmem:[%s1 + $0xb0] sm:$0xff]
    %v253 = vld [vmem:[%s1 + $0xb8] sm:$0xff]
    %v254 = vld [vmem:[%s1 + $0xc0] sm:$0xff]
    %v255 = vld [vmem:[%s1 + $0xc8] sm:$0xff]
    %v256 = vld [vmem:[%s1 + $0xd0] sm:$0xff]
    %v257 = vld [vmem:[%s1 + $0xd8] sm:$0xff]
    %v258 = vld [vmem:[%s1 + $0xe0] sm:$0xff]
    %v259 = vld [vmem:[%s1 + $0xe8] sm:$0xff]
    %v260 = vld [vmem:[%s1 + $0xf0] sm:$0xff]
    %v261 = vld [vmem:[%s1 + $0xf8] sm:$0xff]
    %v262 = vpack.c.bf16 %v52, %v52
    %v263 = vpack.c.bf16 %v53, %v53
    %v264 = vpack.c.bf16 %v54, %v54
    %v265 = vpack.c.bf16 %v55, %v55
    %v266 = vpack.c.bf16 %v56, %v56
    %v267 = vpack.c.bf16 %v57, %v57
    %v268 = vpack.c.bf16 %v58, %v58
    %v269 = vpack.c.bf16 %v59, %v59
    %v270 = vpack.c.bf16 %v60, %v60
    %v271 = vpack.c.bf16 %v61, %v61
    %v272 = vpack.c.bf16 %v62, %v62
    %v273 = vpack.c.bf16 %v63, %v63
    %v274 = vpack.c.bf16 %v64, %v64
    %v275 = vpack.c.bf16 %v65, %v65
    %v276 = vpack.c.bf16 %v66, %v66
    %v277 = vpack.c.bf16 %v67, %v67
    %v294 = vunpack.c.l.b16 %v262
    %v295 = vunpack.c.l.b16 %v263
    %v296 = vunpack.c.l.b16 %v264
    %v297 = vunpack.c.l.b16 %v265
    %v298 = vunpack.c.l.b16 %v266
    %v299 = vunpack.c.l.b16 %v267
    %v300 = vunpack.c.l.b16 %v268
    %v301 = vunpack.c.l.b16 %v269
    %v302 = vunpack.c.l.b16 %v270
    %v303 = vunpack.c.l.b16 %v271
    %v304 = vunpack.c.l.b16 %v272
    %v305 = vunpack.c.l.b16 %v273
    %v306 = vunpack.c.l.b16 %v274
    %v307 = vunpack.c.l.b16 %v275
    %v308 = vunpack.c.l.b16 %v276
    %v309 = vunpack.c.l.b16 %v277
    %s310 = scalar_lea.vmem %s1, 256
    %v311 = vld [vmem:[%s310] sm:$0xff]
    %v312 = vld [vmem:[%s310 + $0x8] sm:$0xff]
    %v313 = vld [vmem:[%s310 + $0x10] sm:$0xff]
    %v314 = vld [vmem:[%s310 + $0x18] sm:$0xff]
    %v315 = vld [vmem:[%s310 + $0x20] sm:$0xff]
    %v316 = vld [vmem:[%s310 + $0x28] sm:$0xff]
    %v317 = vld [vmem:[%s310 + $0x30] sm:$0xff]
    %v318 = vld [vmem:[%s310 + $0x38] sm:$0xff]
    %v319 = vld [vmem:[%s310 + $0x40] sm:$0xff]
    %v320 = vld [vmem:[%s310 + $0x48] sm:$0xff]
    %v321 = vld [vmem:[%s310 + $0x50] sm:$0xff]
    %v322 = vld [vmem:[%s310 + $0x58] sm:$0xff]
    %v323 = vld [vmem:[%s310 + $0x60] sm:$0xff]
    %v324 = vld [vmem:[%s310 + $0x68] sm:$0xff]
    %v325 = vld [vmem:[%s310 + $0x70] sm:$0xff]
    %v326 = vld [vmem:[%s310 + $0x78] sm:$0xff]
    %v327 = vld [vmem:[%s310 + $0x80] sm:$0xff]
    %v328 = vld [vmem:[%s310 + $0x88] sm:$0xff]
    %v329 = vld [vmem:[%s310 + $0x90] sm:$0xff]
    %v330 = vld [vmem:[%s310 + $0x98] sm:$0xff]
    %v331 = vld [vmem:[%s310 + $0xa0] sm:$0xff]
    %v332 = vld [vmem:[%s310 + $0xa8] sm:$0xff]
    %v333 = vld [vmem:[%s310 + $0xb0] sm:$0xff]
    %v334 = vld [vmem:[%s310 + $0xb8] sm:$0xff]
    %v335 = vld [vmem:[%s310 + $0xc0] sm:$0xff]
    %v336 = vld [vmem:[%s310 + $0xc8] sm:$0xff]
    %v337 = vld [vmem:[%s310 + $0xd0] sm:$0xff]
    %v338 = vld [vmem:[%s310 + $0xd8] sm:$0xff]
    %v339 = vld [vmem:[%s310 + $0xe0] sm:$0xff]
    %v340 = vld [vmem:[%s310 + $0xe8] sm:$0xff]
    %v341 = vld [vmem:[%s310 + $0xf0] sm:$0xff]
    %v342 = vld [vmem:[%s310 + $0xf8] sm:$0xff]
    %v343 = vpack.c.b16 %v296, %v294
    %v344 = vpack.c.b16 %v297, %v295
    %v345 = vpack.c.b16 %v300, %v298
    %v346 = vpack.c.b16 %v301, %v299
    %v347 = vpack.c.b16 %v304, %v302
    %v348 = vpack.c.b16 %v305, %v303
    %v349 = vpack.c.b16 %v308, %v306
    %v350 = vpack.c.b16 %v309, %v307
    %v391 = vunpack.c.l.b16 %v311
    %v392 = vunpack.c.h.b16 %v311
    %v393 = vunpack.c.l.b16 %v312
    %v394 = vunpack.c.h.b16 %v312
    %v395 = vunpack.c.l.b16 %v313
    %v396 = vunpack.c.h.b16 %v313
    %v397 = vunpack.c.l.b16 %v314
    %v398 = vunpack.c.h.b16 %v314
    %v399 = vunpack.c.l.b16 %v315
    %v400 = vunpack.c.h.b16 %v315
    %v401 = vunpack.c.l.b16 %v316
    %v402 = vunpack.c.h.b16 %v316
    %v403 = vunpack.c.l.b16 %v317
    %v404 = vunpack.c.h.b16 %v317
    %v405 = vunpack.c.l.b16 %v318
    %v406 = vunpack.c.h.b16 %v318
    %v407 = vunpack.c.l.b16 %v319
    %v408 = vunpack.c.h.b16 %v319
    %v409 = vunpack.c.l.b16 %v320
    %v410 = vunpack.c.h.b16 %v320
    %v411 = vunpack.c.l.b16 %v321
    %v412 = vunpack.c.h.b16 %v321
    %v413 = vunpack.c.l.b16 %v322
    %v414 = vunpack.c.h.b16 %v322
    %v415 = vunpack.c.l.b16 %v323
    %v416 = vunpack.c.h.b16 %v323
    %v417 = vunpack.c.l.b16 %v324
    %v418 = vunpack.c.h.b16 %v324
    %v419 = vunpack.c.l.b16 %v325
    %v420 = vunpack.c.h.b16 %v325
    %v421 = vunpack.c.l.b16 %v326
    %v422 = vunpack.c.h.b16 %v326
    %v423 = vunpack.c.l.b16 %v327
    %v424 = vunpack.c.h.b16 %v327
    %v425 = vunpack.c.l.b16 %v328
    %v426 = vunpack.c.h.b16 %v328
    %v427 = vunpack.c.l.b16 %v329
    %v428 = vunpack.c.h.b16 %v329
    %v429 = vunpack.c.l.b16 %v330
    %v430 = vunpack.c.h.b16 %v330
    %v431 = vunpack.c.l.b16 %v331
    %v432 = vunpack.c.h.b16 %v331
    %v433 = vunpack.c.l.b16 %v332
    %v434 = vunpack.c.h.b16 %v332
    %v435 = vunpack.c.l.b16 %v333
    %v436 = vunpack.c.h.b16 %v333
    %v437 = vunpack.c.l.b16 %v334
    %v438 = vunpack.c.h.b16 %v334
    %v439 = vunpack.c.l.b16 %v335
    %v440 = vunpack.c.h.b16 %v335
    %v441 = vunpack.c.l.b16 %v336
    %v442 = vunpack.c.h.b16 %v336
    %v443 = vunpack.c.l.b16 %v337
    %v444 = vunpack.c.h.b16 %v337
    %v445 = vunpack.c.l.b16 %v338
    %v446 = vunpack.c.h.b16 %v338
    %v447 = vunpack.c.l.b16 %v339
    %v448 = vunpack.c.h.b16 %v339
    %v449 = vunpack.c.l.b16 %v340
    %v450 = vunpack.c.h.b16 %v340
    %v451 = vunpack.c.l.b16 %v341
    %v452 = vunpack.c.h.b16 %v341
    %v453 = vunpack.c.l.b16 %v342
    %v454 = vunpack.c.h.b16 %v342
    %v455 = vpack.c.b16 %v393, %v391
    %v456 = vpack.c.b16 %v394, %v392
    %v457 = vpack.c.b16 %v397, %v395
    %v458 = vpack.c.b16 %v398, %v396
    %v459 = vpack.c.b16 %v401, %v399
    %v460 = vpack.c.b16 %v402, %v400
    %v461 = vpack.c.b16 %v405, %v403
    %v462 = vpack.c.b16 %v406, %v404
    %v463 = vpack.c.b16 %v409, %v407
    %v464 = vpack.c.b16 %v410, %v408
    %v465 = vpack.c.b16 %v413, %v411
    %v466 = vpack.c.b16 %v414, %v412
    %v467 = vpack.c.b16 %v417, %v415
    %v468 = vpack.c.b16 %v418, %v416
    %v469 = vpack.c.b16 %v421, %v419
    %v470 = vpack.c.b16 %v422, %v420
    %v471 = vpack.c.b16 %v425, %v423
    %v472 = vpack.c.b16 %v426, %v424
    %v473 = vpack.c.b16 %v429, %v427
    %v474 = vpack.c.b16 %v430, %v428
    %v475 = vpack.c.b16 %v433, %v431
    %v476 = vpack.c.b16 %v434, %v432
    %v477 = vpack.c.b16 %v437, %v435
    %v478 = vpack.c.b16 %v438, %v436
    %v479 = vpack.c.b16 %v441, %v439
    %v480 = vpack.c.b16 %v442, %v440
    %v481 = vpack.c.b16 %v445, %v443
    %v482 = vpack.c.b16 %v446, %v444
    %v483 = vpack.c.b16 %v449, %v447
    %v484 = vpack.c.b16 %v450, %v448
    %v485 = vpack.c.b16 %v453, %v451
    %v486 = vpack.c.b16 %v454, %v452
    %519 = vmatprep.subr.bf16.mxu0 %v456
    %520 = vmatpush1.bf16.msra.mxu0 %v455
    %521 = vmatprep.subr.bf16.mxu0 %v458
    %522 = vmatpush1.bf16.msra.mxu0 %v457
    %523 = vmatprep.subr.bf16.mxu0 %v460
    %524 = vmatpush1.bf16.msra.mxu0 %v459
    %525 = vmatprep.subr.bf16.mxu0 %v462
    %526 = vmatpush1.bf16.msra.mxu0 %v461
    %527 = vmatprep.subr.bf16.mxu0 %v464
    %528 = vmatpush1.bf16.msra.mxu0 %v463
    %529 = vmatprep.subr.bf16.mxu0 %v466
    %530 = vmatpush1.bf16.msra.mxu0 %v465
    %531 = vmatprep.subr.bf16.mxu0 %v468
    %532 = vmatpush1.bf16.msra.mxu0 %v467
    %533 = vmatprep.subr.bf16.mxu0 %v470
    %534 = vmatpush1.bf16.msra.mxu0 %v469
    %535 = vmatprep.subr.bf16.mxu0 %v472
    %536 = vmatpush1.bf16.msra.mxu0 %v471
    %537 = vmatprep.subr.bf16.mxu0 %v474
    %538 = vmatpush1.bf16.msra.mxu0 %v473
    %539 = vmatprep.subr.bf16.mxu0 %v476
    %540 = vmatpush1.bf16.msra.mxu0 %v475
    %541 = vmatprep.subr.bf16.mxu0 %v478
    %542 = vmatpush1.bf16.msra.mxu0 %v477
    %543 = vmatprep.subr.bf16.mxu0 %v480
    %544 = vmatpush1.bf16.msra.mxu0 %v479
    %545 = vmatprep.subr.bf16.mxu0 %v482
    %546 = vmatpush1.bf16.msra.mxu0 %v481
    %547 = vmatprep.subr.bf16.mxu0 %v484
    %548 = vmatpush1.bf16.msra.mxu0 %v483
    %549 = vmatprep.subr.bf16.mxu0 %v486
    %550 = vmatpush1.bf16.msra.mxu0 %v485
    %551 = vmatprep.mubr.bf16.mxu0 %v344
    %552 = vmatmul.mubr.bf16.gmra.mrb[0].mxu0 %v343
    %v553 = vpop.f32.mrb[0].mxu0
    %v554 = vadd.f32 0.0, %v553
    %v555 = vpop.f32.mrb[0].mxu0
    %v556 = vadd.f32 0.0, %v555
    %v557 = vpop.f32.mrb[0].mxu0
    %v558 = vadd.f32 0.0, %v557
    %v559 = vpop.f32.mrb[0].mxu0
    %v560 = vadd.f32 0.0, %v559
    %561 = vmatprep.mubr.bf16.mxu0 %v346
    %562 = vmatmul.mubr.bf16.gmra.mrb[0].mxu0 %v345
    %v563 = vpop.f32.mrb[0].mxu0
    %v564 = vadd.f32 0.0, %v563
    %v565 = vpop.f32.mrb[0].mxu0
    %v566 = vadd.f32 0.0, %v565
    %v567 = vpop.f32.mrb[0].mxu0
    %v568 = vadd.f32 0.0, %v567
    %v569 = vpop.f32.mrb[0].mxu0
    %v570 = vadd.f32 0.0, %v569
    %571 = vmatprep.mubr.bf16.mxu0 %v348
    %572 = vmatmul.mubr.bf16.gmra.mrb[0].mxu0 %v347
    %v573 = vpop.f32.mrb[0].mxu0
    %v574 = vadd.f32 0.0, %v573
    %v575 = vpop.f32.mrb[0].mxu0
    %v576 = vadd.f32 0.0, %v575
    %v577 = vpop.f32.mrb[0].mxu0
    %v578 = vadd.f32 0.0, %v577
    %v579 = vpop.f32.mrb[0].mxu0
    %v580 = vadd.f32 0.0, %v579
    %581 = vmatprep.mubr.bf16.mxu0 %v350
    %582 = vmatmul.mubr.bf16.gmra.mrb[0].mxu0 %v349
    %v583 = vpop.f32.mrb[0].mxu0
    %v584 = vadd.f32 0.0, %v583
    %v585 = vpop.f32.mrb[0].mxu0
    %v586 = vadd.f32 0.0, %v585
    %v587 = vpop.f32.mrb[0].mxu0
    %v588 = vadd.f32 0.0, %v587
    %v589 = vpop.f32.mrb[0].mxu0
    %v590 = vadd.f32 0.0, %v589
    %591 = vdwg.mxu0
    %v592 = vpack.c.b16 %v216, %v214
    %v593 = vpack.c.b16 %v217, %v215
    %v594 = vpack.c.b16 %v220, %v218
    %v595 = vpack.c.b16 %v221, %v219
    %v596 = vpack.c.b16 %v224, %v222
    %v597 = vpack.c.b16 %v225, %v223
    %v598 = vpack.c.b16 %v228, %v226
    %v599 = vpack.c.b16 %v229, %v227
    %v640 = vunpack.c.l.b16 %v230
    %v641 = vunpack.c.h.b16 %v230
    %v642 = vunpack.c.l.b16 %v231
    %v643 = vunpack.c.h.b16 %v231
    %v644 = vunpack.c.l.b16 %v232
    %v645 = vunpack.c.h.b16 %v232
    %v646 = vunpack.c.l.b16 %v233
    %v647 = vunpack.c.h.b16 %v233
    %v648 = vunpack.c.l.b16 %v234
    %v649 = vunpack.c.h.b16 %v234
    %v650 = vunpack.c.l.b16 %v235
    %v651 = vunpack.c.h.b16 %v235
    %v652 = vunpack.c.l.b16 %v236
    %v653 = vunpack.c.h.b16 %v236
    %v654 = vunpack.c.l.b16 %v237
    %v655 = vunpack.c.h.b16 %v237
    %v656 = vunpack.c.l.b16 %v238
    %v657 = vunpack.c.h.b16 %v238
    %v658 = vunpack.c.l.b16 %v239
    %v659 = vunpack.c.h.b16 %v239
    %v660 = vunpack.c.l.b16 %v240
    %v661 = vunpack.c.h.b16 %v240
    %v662 = vunpack.c.l.b16 %v241
    %v663 = vunpack.c.h.b16 %v241
    %v664 = vunpack.c.l.b16 %v242
    %v665 = vunpack.c.h.b16 %v242
    %v666 = vunpack.c.l.b16 %v243
    %v667 = vunpack.c.h.b16 %v243
    %v668 = vunpack.c.l.b16 %v244
    %v669 = vunpack.c.h.b16 %v244
    %v670 = vunpack.c.l.b16 %v245
    %v671 = vunpack.c.h.b16 %v245
    %v672 = vunpack.c.l.b16 %v246
    %v673 = vunpack.c.h.b16 %v246
    %v674 = vunpack.c.l.b16 %v247
    %v675 = vunpack.c.h.b16 %v247
    %v676 = vunpack.c.l.b16 %v248
    %v677 = vunpack.c.h.b16 %v248
    %v678 = vunpack.c.l.b16 %v249
    %v679 = vunpack.c.h.b16 %v249
    %v680 = vunpack.c.l.b16 %v250
    %v681 = vunpack.c.h.b16 %v250
    %v682 = vunpack.c.l.b16 %v251
    %v683 = vunpack.c.h.b16 %v251
    %v684 = vunpack.c.l.b16 %v252
    %v685 = vunpack.c.h.b16 %v252
    %v686 = vunpack.c.l.b16 %v253
    %v687 = vunpack.c.h.b16 %v253
    %v688 = vunpack.c.l.b16 %v254
    %v689 = vunpack.c.h.b16 %v254
    %v690 = vunpack.c.l.b16 %v255
    %v691 = vunpack.c.h.b16 %v255
    %v692 = vunpack.c.l.b16 %v256
    %v693 = vunpack.c.h.b16 %v256
    %v694 = vunpack.c.l.b16 %v257
    %v695 = vunpack.c.h.b16 %v257
    %v696 = vunpack.c.l.b16 %v258
    %v697 = vunpack.c.h.b16 %v258
    %v698 = vunpack.c.l.b16 %v259
    %v699 = vunpack.c.h.b16 %v259
    %v700 = vunpack.c.l.b16 %v260
    %v701 = vunpack.c.h.b16 %v260
    %v702 = vunpack.c.l.b16 %v261
    %v703 = vunpack.c.h.b16 %v261
    %v704 = vpack.c.b16 %v642, %v640
    %v705 = vpack.c.b16 %v643, %v641
    %v706 = vpack.c.b16 %v646, %v644
    %v707 = vpack.c.b16 %v647, %v645
    %v708 = vpack.c.b16 %v650, %v648
    %v709 = vpack.c.b16 %v651, %v649
    %v710 = vpack.c.b16 %v654, %v652
    %v711 = vpack.c.b16 %v655, %v653
    %v712 = vpack.c.b16 %v658, %v656
    %v713 = vpack.c.b16 %v659, %v657
    %v714 = vpack.c.b16 %v662, %v660
    %v715 = vpack.c.b16 %v663, %v661
    %v716 = vpack.c.b16 %v666, %v664
    %v717 = vpack.c.b16 %v667, %v665
    %v718 = vpack.c.b16 %v670, %v668
    %v719 = vpack.c.b16 %v671, %v669
    %v720 = vpack.c.b16 %v674, %v672
    %v721 = vpack.c.b16 %v675, %v673
    %v722 = vpack.c.b16 %v678, %v676
    %v723 = vpack.c.b16 %v679, %v677
    %v724 = vpack.c.b16 %v682, %v680
    %v725 = vpack.c.b16 %v683, %v681
    %v726 = vpack.c.b16 %v686, %v684
    %v727 = vpack.c.b16 %v687, %v685
    %v728 = vpack.c.b16 %v690, %v688
    %v729 = vpack.c.b16 %v691, %v689
    %v730 = vpack.c.b16 %v694, %v692
    %v731 = vpack.c.b16 %v695, %v693
    %v732 = vpack.c.b16 %v698, %v696
    %v733 = vpack.c.b16 %v699, %v697
    %v734 = vpack.c.b16 %v702, %v700
    %v735 = vpack.c.b16 %v703, %v701
    %768 = vmatprep.subr.bf16.mxu0 %v705
    %769 = vmatpush1.bf16.msra.mxu0 %v704
    %770 = vmatprep.subr.bf16.mxu0 %v707
    %771 = vmatpush1.bf16.msra.mxu0 %v706
    %772 = vmatprep.subr.bf16.mxu0 %v709
    %773 = vmatpush1.bf16.msra.mxu0 %v708
    %774 = vmatprep.subr.bf16.mxu0 %v711
    %775 = vmatpush1.bf16.msra.mxu0 %v710
    %776 = vmatprep.subr.bf16.mxu0 %v713
    %777 = vmatpush1.bf16.msra.mxu0 %v712
    %778 = vmatprep.subr.bf16.mxu0 %v715
    %779 = vmatpush1.bf16.msra.mxu0 %v714
    %780 = vmatprep.subr.bf16.mxu0 %v717
    %781 = vmatpush1.bf16.msra.mxu0 %v716
    %782 = vmatprep.subr.bf16.mxu0 %v719
    %783 = vmatpush1.bf16.msra.mxu0 %v718
    %784 = vmatprep.subr.bf16.mxu0 %v721
    %785 = vmatpush1.bf16.msra.mxu0 %v720
    %786 = vmatprep.subr.bf16.mxu0 %v723
    %787 = vmatpush1.bf16.msra.mxu0 %v722
    %788 = vmatprep.subr.bf16.mxu0 %v725
    %789 = vmatpush1.bf16.msra.mxu0 %v724
    %790 = vmatprep.subr.bf16.mxu0 %v727
    %791 = vmatpush1.bf16.msra.mxu0 %v726
    %792 = vmatprep.subr.bf16.mxu0 %v729
    %793 = vmatpush1.bf16.msra.mxu0 %v728
    %794 = vmatprep.subr.bf16.mxu0 %v731
    %795 = vmatpush1.bf16.msra.mxu0 %v730
    %796 = vmatprep.subr.bf16.mxu0 %v733
    %797 = vmatpush1.bf16.msra.mxu0 %v732
    %798 = vmatprep.subr.bf16.mxu0 %v735
    %799 = vmatpush1.bf16.msra.mxu0 %v734
    %800 = vmatprep.mubr.bf16.mxu0 %v593
    %801 = vmatmul.mubr.bf16.gmra.mrb[0].mxu0 %v592
    %v802 = vpop.f32.mrb[0].mxu0
    %v803 = vadd.f32 %v554, %v802
    %v804 = vpop.f32.mrb[0].mxu0
    %v805 = vadd.f32 %v556, %v804
    %v806 = vpop.f32.mrb[0].mxu0
    %v807 = vadd.f32 %v558, %v806
    %v808 = vpop.f32.mrb[0].mxu0
    %v809 = vadd.f32 %v560, %v808
    %810 = vmatprep.mubr.bf16.mxu0 %v595
    %811 = vmatmul.mubr.bf16.gmra.mrb[0].mxu0 %v594
    %v812 = vpop.f32.mrb[0].mxu0
    %v813 = vadd.f32 %v564, %v812
    %v814 = vpop.f32.mrb[0].mxu0
    %v815 = vadd.f32 %v566, %v814
    %v816 = vpop.f32.mrb[0].mxu0
    %v817 = vadd.f32 %v568, %v816
    %v818 = vpop.f32.mrb[0].mxu0
    %v819 = vadd.f32 %v570, %v818
    %820 = vmatprep.mubr.bf16.mxu0 %v597
    %821 = vmatmul.mubr.bf16.gmra.mrb[0].mxu0 %v596
    %v822 = vpop.f32.mrb[0].mxu0
    %v823 = vadd.f32 %v574, %v822
    %v824 = vpop.f32.mrb[0].mxu0
    %v825 = vadd.f32 %v576, %v824
    %v826 = vpop.f32.mrb[0].mxu0
    %v827 = vadd.f32 %v578, %v826
    %v828 = vpop.f32.mrb[0].mxu0
    %v829 = vadd.f32 %v580, %v828
    %830 = vmatprep.mubr.bf16.mxu0 %v599
    %831 = vmatmul.mubr.bf16.gmra.mrb[0].mxu0 %v598
    %v832 = vpop.f32.mrb[0].mxu0
    %v833 = vadd.f32 %v584, %v832
    %v834 = vpop.f32.mrb[0].mxu0
    %v835 = vadd.f32 %v586, %v834
    %v836 = vpop.f32.mrb[0].mxu0
    %v837 = vadd.f32 %v588, %v836
    %v838 = vpop.f32.mrb[0].mxu0
    %v839 = vadd.f32 %v590, %v838
    %840 = vdwg.mxu0
    %v841 = vpack.c.bf16 %v166, %v166
    %v842 = vpack.c.bf16 %v167, %v167
    %v843 = vpack.c.bf16 %v168, %v168
    %v844 = vpack.c.bf16 %v169, %v169
    %v845 = vpack.c.bf16 %v170, %v170
    %v846 = vpack.c.bf16 %v171, %v171
    %v847 = vpack.c.bf16 %v172, %v172
    %v848 = vpack.c.bf16 %v173, %v173
    %v849 = vpack.c.bf16 %v174, %v174
    %v850 = vpack.c.bf16 %v175, %v175
    %v851 = vpack.c.bf16 %v176, %v176
    %v852 = vpack.c.bf16 %v177, %v177
    %v853 = vpack.c.bf16 %v178, %v178
    %v854 = vpack.c.bf16 %v179, %v179
    %v855 = vpack.c.bf16 %v180, %v180
    %v856 = vpack.c.bf16 %v181, %v181
    %v873 = vunpack.c.l.b16 %v841
    %v874 = vunpack.c.l.b16 %v842
    %v875 = vunpack.c.l.b16 %v843
    %v876 = vunpack.c.l.b16 %v844
    %v877 = vunpack.c.l.b16 %v845
    %v878 = vunpack.c.l.b16 %v846
    %v879 = vunpack.c.l.b16 %v847
    %v880 = vunpack.c.l.b16 %v848
    %v881 = vunpack.c.l.b16 %v849
    %v882 = vunpack.c.l.b16 %v850
    %v883 = vunpack.c.l.b16 %v851
    %v884 = vunpack.c.l.b16 %v852
    %v885 = vunpack.c.l.b16 %v853
    %v886 = vunpack.c.l.b16 %v854
    %v887 = vunpack.c.l.b16 %v855
    %v888 = vunpack.c.l.b16 %v856
    %s889 = scalar_lea.vmem %s1, 512
    %v890 = vld [vmem:[%s889] sm:$0xff]
    %v891 = vld [vmem:[%s889 + $0x8] sm:$0xff]
    %v892 = vld [vmem:[%s889 + $0x10] sm:$0xff]
    %v893 = vld [vmem:[%s889 + $0x18] sm:$0xff]
    %v894 = vld [vmem:[%s889 + $0x20] sm:$0xff]
    %v895 = vld [vmem:[%s889 + $0x28] sm:$0xff]
    %v896 = vld [vmem:[%s889 + $0x30] sm:$0xff]
    %v897 = vld [vmem:[%s889 + $0x38] sm:$0xff]
    %v898 = vld [vmem:[%s889 + $0x40] sm:$0xff]
    %v899 = vld [vmem:[%s889 + $0x48] sm:$0xff]
    %v900 = vld [vmem:[%s889 + $0x50] sm:$0xff]
    %v901 = vld [vmem:[%s889 + $0x58] sm:$0xff]
    %v902 = vld [vmem:[%s889 + $0x60] sm:$0xff]
    %v903 = vld [vmem:[%s889 + $0x68] sm:$0xff]
    %v904 = vld [vmem:[%s889 + $0x70] sm:$0xff]
    %v905 = vld [vmem:[%s889 + $0x78] sm:$0xff]
    %v906 = vld [vmem:[%s889 + $0x80] sm:$0xff]
    %v907 = vld [vmem:[%s889 + $0x88] sm:$0xff]
    %v908 = vld [vmem:[%s889 + $0x90] sm:$0xff]
    %v909 = vld [vmem:[%s889 + $0x98] sm:$0xff]
    %v910 = vld [vmem:[%s889 + $0xa0] sm:$0xff]
    %v911 = vld [vmem:[%s889 + $0xa8] sm:$0xff]
    %v912 = vld [vmem:[%s889 + $0xb0] sm:$0xff]
    %v913 = vld [vmem:[%s889 + $0xb8] sm:$0xff]
    %v914 = vld [vmem:[%s889 + $0xc0] sm:$0xff]
    %v915 = vld [vmem:[%s889 + $0xc8] sm:$0xff]
    %v916 = vld [vmem:[%s889 + $0xd0] sm:$0xff]
    %v917 = vld [vmem:[%s889 + $0xd8] sm:$0xff]
    %v918 = vld [vmem:[%s889 + $0xe0] sm:$0xff]
    %v919 = vld [vmem:[%s889 + $0xe8] sm:$0xff]
    %v920 = vld [vmem:[%s889 + $0xf0] sm:$0xff]
    %v921 = vld [vmem:[%s889 + $0xf8] sm:$0xff]
    %v922 = vpack.c.b16 %v875, %v873
    %v923 = vpack.c.b16 %v876, %v874
    %v924 = vpack.c.b16 %v879, %v877
    %v925 = vpack.c.b16 %v880, %v878
    %v926 = vpack.c.b16 %v883, %v881
    %v927 = vpack.c.b16 %v884, %v882
    %v928 = vpack.c.b16 %v887, %v885
    %v929 = vpack.c.b16 %v888, %v886
    %v970 = vunpack.c.l.b16 %v890
    %v971 = vunpack.c.h.b16 %v890
    %v972 = vunpack.c.l.b16 %v891
    %v973 = vunpack.c.h.b16 %v891
    %v974 = vunpack.c.l.b16 %v892
    %v975 = vunpack.c.h.b16 %v892
    %v976 = vunpack.c.l.b16 %v893
    %v977 = vunpack.c.h.b16 %v893
    %v978 = vunpack.c.l.b16 %v894
    %v979 = vunpack.c.h.b16 %v894
    %v980 = vunpack.c.l.b16 %v895
    %v981 = vunpack.c.h.b16 %v895
    %v982 = vunpack.c.l.b16 %v896
    %v983 = vunpack.c.h.b16 %v896
    %v984 = vunpack.c.l.b16 %v897
    %v985 = vunpack.c.h.b16 %v897
    %v986 = vunpack.c.l.b16 %v898
    %v987 = vunpack.c.h.b16 %v898
    %v988 = vunpack.c.l.b16 %v899
    %v989 = vunpack.c.h.b16 %v899
    %v990 = vunpack.c.l.b16 %v900
    %v991 = vunpack.c.h.b16 %v900
    %v992 = vunpack.c.l.b16 %v901
    %v993 = vunpack.c.h.b16 %v901
    %v994 = vunpack.c.l.b16 %v902
    %v995 = vunpack.c.h.b16 %v902
    %v996 = vunpack.c.l.b16 %v903
    %v997 = vunpack.c.h.b16 %v903
    %v998 = vunpack.c.l.b16 %v904
    %v999 = vunpack.c.h.b16 %v904
    %v1000 = vunpack.c.l.b16 %v905
    %v1001 = vunpack.c.h.b16 %v905
    %v1002 = vunpack.c.l.b16 %v906
    %v1003 = vunpack.c.h.b16 %v906
    %v1004 = vunpack.c.l.b16 %v907
    %v1005 = vunpack.c.h.b16 %v907
    %v1006 = vunpack.c.l.b16 %v908
    %v1007 = vunpack.c.h.b16 %v908
    %v1008 = vunpack.c.l.b16 %v909
    %v1009 = vunpack.c.h.b16 %v909
    %v1010 = vunpack.c.l.b16 %v910
    %v1011 = vunpack.c.h.b16 %v910
    %v1012 = vunpack.c.l.b16 %v911
    %v1013 = vunpack.c.h.b16 %v911
    %v1014 = vunpack.c.l.b16 %v912
    %v1015 = vunpack.c.h.b16 %v912
    %v1016 = vunpack.c.l.b16 %v913
    %v1017 = vunpack.c.h.b16 %v913
    %v1018 = vunpack.c.l.b16 %v914
    %v1019 = vunpack.c.h.b16 %v914
    %v1020 = vunpack.c.l.b16 %v915
    %v1021 = vunpack.c.h.b16 %v915
    %v1022 = vunpack.c.l.b16 %v916
    %v1023 = vunpack.c.h.b16 %v916
    %v1024 = vunpack.c.l.b16 %v917
    %v1025 = vunpack.c.h.b16 %v917
    %v1026 = vunpack.c.l.b16 %v918
    %v1027 = vunpack.c.h.b16 %v918
    %v1028 = vunpack.c.l.b16 %v919
    %v1029 = vunpack.c.h.b16 %v919
    %v1030 = vunpack.c.l.b16 %v920
    %v1031 = vunpack.c.h.b16 %v920
    %v1032 = vunpack.c.l.b16 %v921
    %v1033 = vunpack.c.h.b16 %v921
    %v1034 = vpack.c.b16 %v972, %v970
    %v1035 = vpack.c.b16 %v973, %v971
    %v1036 = vpack.c.b16 %v976, %v974
    %v1037 = vpack.c.b16 %v977, %v975
    %v1038 = vpack.c.b16 %v980, %v978
    %v1039 = vpack.c.b16 %v981, %v979
    %v1040 = vpack.c.b16 %v984, %v982
    %v1041 = vpack.c.b16 %v985, %v983
    %v1042 = vpack.c.b16 %v988, %v986
    %v1043 = vpack.c.b16 %v989, %v987
    %v1044 = vpack.c.b16 %v992, %v990
    %v1045 = vpack.c.b16 %v993, %v991
    %v1046 = vpack.c.b16 %v996, %v994
    %v1047 = vpack.c.b16 %v997, %v995
    %v1048 = vpack.c.b16 %v1000, %v998
    %v1049 = vpack.c.b16 %v1001, %v999
    %v1050 = vpack.c.b16 %v1004, %v1002
    %v1051 = vpack.c.b16 %v1005, %v1003
    %v1052 = vpack.c.b16 %v1008, %v1006
    %v1053 = vpack.c.b16 %v1009, %v1007
    %v1054 = vpack.c.b16 %v1012, %v1010
    %v1055 = vpack.c.b16 %v1013, %v1011
    %v1056 = vpack.c.b16 %v1016, %v1014
    %v1057 = vpack.c.b16 %v1017, %v1015
    %v1058 = vpack.c.b16 %v1020, %v1018
    %v1059 = vpack.c.b16 %v1021, %v1019
    %v1060 = vpack.c.b16 %v1024, %v1022
    %v1061 = vpack.c.b16 %v1025, %v1023
    %v1062 = vpack.c.b16 %v1028, %v1026
    %v1063 = vpack.c.b16 %v1029, %v1027
    %v1064 = vpack.c.b16 %v1032, %v1030
    %v1065 = vpack.c.b16 %v1033, %v1031
    %1098 = vmatprep.subr.bf16.mxu0 %v1035
    %1099 = vmatpush1.bf16.msra.mxu0 %v1034
    %1100 = vmatprep.subr.bf16.mxu0 %v1037
    %1101 = vmatpush1.bf16.msra.mxu0 %v1036
    %1102 = vmatprep.subr.bf16.mxu0 %v1039
    %1103 = vmatpush1.bf16.msra.mxu0 %v1038
    %1104 = vmatprep.subr.bf16.mxu0 %v1041
    %1105 = vmatpush1.bf16.msra.mxu0 %v1040
    %1106 = vmatprep.subr.bf16.mxu0 %v1043
    %1107 = vmatpush1.bf16.msra.mxu0 %v1042
    %1108 = vmatprep.subr.bf16.mxu0 %v1045
    %1109 = vmatpush1.bf16.msra.mxu0 %v1044
    %1110 = vmatprep.subr.bf16.mxu0 %v1047
    %1111 = vmatpush1.bf16.msra.mxu0 %v1046
    %1112 = vmatprep.subr.bf16.mxu0 %v1049
    %1113 = vmatpush1.bf16.msra.mxu0 %v1048
    %1114 = vmatprep.subr.bf16.mxu0 %v1051
    %1115 = vmatpush1.bf16.msra.mxu0 %v1050
    %1116 = vmatprep.subr.bf16.mxu0 %v1053
    %1117 = vmatpush1.bf16.msra.mxu0 %v1052
    %1118 = vmatprep.subr.bf16.mxu0 %v1055
    %1119 = vmatpush1.bf16.msra.mxu0 %v1054
    %1120 = vmatprep.subr.bf16.mxu0 %v1057
    %1121 = vmatpush1.bf16.msra.mxu0 %v1056
    %1122 = vmatprep.subr.bf16.mxu0 %v1059
    %1123 = vmatpush1.bf16.msra.mxu0 %v1058
    %1124 = vmatprep.subr.bf16.mxu0 %v1061
    %1125 = vmatpush1.bf16.msra.mxu0 %v1060
    %1126 = vmatprep.subr.bf16.mxu0 %v1063
    %1127 = vmatpush1.bf16.msra.mxu0 %v1062
    %1128 = vmatprep.subr.bf16.mxu0 %v1065
    %1129 = vmatpush1.bf16.msra.mxu0 %v1064
    %1130 = vmatprep.mubr.bf16.mxu0 %v923
    %1131 = vmatmul.mubr.bf16.gmra.mrb[0].mxu0 %v922
    %v1132 = vpop.f32.mrb[0].mxu0
    %v1133 = vadd.f32 0.0, %v1132
    %v1134 = vpop.f32.mrb[0].mxu0
    %v1135 = vadd.f32 0.0, %v1134
    %v1136 = vpop.f32.mrb[0].mxu0
    %v1137 = vadd.f32 0.0, %v1136
    %v1138 = vpop.f32.mrb[0].mxu0
    %v1139 = vadd.f32 0.0, %v1138
    %1140 = vmatprep.mubr.bf16.mxu0 %v925
    %1141 = vmatmul.mubr.bf16.gmra.mrb[0].mxu0 %v924
    %v1142 = vpop.f32.mrb[0].mxu0
    %v1143 = vadd.f32 0.0, %v1142
    %v1144 = vpop.f32.mrb[0].mxu0
    %v1145 = vadd.f32 0.0, %v1144
    %v1146 = vpop.f32.mrb[0].mxu0
    %v1147 = vadd.f32 0.0, %v1146
    %v1148 = vpop.f32.mrb[0].mxu0
    %v1149 = vadd.f32 0.0, %v1148
    %1150 = vmatprep.mubr.bf16.mxu0 %v927
    %1151 = vmatmul.mubr.bf16.gmra.mrb[0].mxu0 %v926
    %v1152 = vpop.f32.mrb[0].mxu0
    %v1153 = vadd.f32 0.0, %v1152
    %v1154 = vpop.f32.mrb[0].mxu0
    %v1155 = vadd.f32 0.0, %v1154
    %v1156 = vpop.f32.mrb[0].mxu0
    %v1157 = vadd.f32 0.0, %v1156
    %v1158 = vpop.f32.mrb[0].mxu0
    %v1159 = vadd.f32 0.0, %v1158
    %1160 = vmatprep.mubr.bf16.mxu0 %v929
    %1161 = vmatmul.mubr.bf16.gmra.mrb[0].mxu0 %v928
    %v1162 = vpop.f32.mrb[0].mxu0
    %v1163 = vadd.f32 0.0, %v1162
    %v1164 = vpop.f32.mrb[0].mxu0
    %v1165 = vadd.f32 0.0, %v1164
    %v1166 = vpop.f32.mrb[0].mxu0
    %v1167 = vadd.f32 0.0, %v1166
    %v1168 = vpop.f32.mrb[0].mxu0
    %v1169 = vadd.f32 0.0, %v1168
    %1170 = vdwg.mxu0
    %v1171 = vadd.f32 %v803, %v1133
    %v1172 = vadd.f32 %v805, %v1135
    %v1173 = vadd.f32 %v807, %v1137
    %v1174 = vadd.f32 %v809, %v1139
    %v1175 = vadd.f32 %v813, %v1143
    %v1176 = vadd.f32 %v815, %v1145
    %v1177 = vadd.f32 %v817, %v1147
    %v1178 = vadd.f32 %v819, %v1149
    %v1179 = vadd.f32 %v823, %v1153
    %v1180 = vadd.f32 %v825, %v1155
    %v1181 = vadd.f32 %v827, %v1157
    %v1182 = vadd.f32 %v829, %v1159
    %v1183 = vadd.f32 %v833, %v1163
    %v1184 = vadd.f32 %v835, %v1165
    %v1185 = vadd.f32 %v837, %v1167
    %v1186 = vadd.f32 %v839, %v1169
    %v1187 = vld [vmem:[%s2] sm:$0x3]
    %v1189 = vlaneseq
    %v1190 = vshrl.u32 %v1189, 7
    %v1191 = vsub.s32 0, %v1190
    %v1192 = vrot.slane %v1187, %v1191
    %v1193 = vlaneseq
    %v1194 = vshrl.u32 %v1193, 7
    %v1195 = vsub.s32 1, %v1194
    %v1196 = vrot.slane %v1187, %v1195
    %v1199 = vmul.f32 %v1171, %v1192
    %v1200 = vmul.f32 %v1172, %v1196
    %v1201 = vmul.f32 %v1173, %v1192
    %v1202 = vmul.f32 %v1174, %v1196
    %v1203 = vmul.f32 %v1175, %v1192
    %v1204 = vmul.f32 %v1176, %v1196
    %v1205 = vmul.f32 %v1177, %v1192
    %v1206 = vmul.f32 %v1178, %v1196
    %v1207 = vmul.f32 %v1179, %v1192
    %v1208 = vmul.f32 %v1180, %v1196
    %v1209 = vmul.f32 %v1181, %v1192
    %v1210 = vmul.f32 %v1182, %v1196
    %v1211 = vmul.f32 %v1183, %v1192
    %v1212 = vmul.f32 %v1184, %v1196
    %v1213 = vmul.f32 %v1185, %v1192
    %v1214 = vmul.f32 %v1186, %v1196
    %v1215 = vld [vmem:[%s3] sm:$0x3]
    %v1217 = vlaneseq
    %v1218 = vshrl.u32 %v1217, 7
    %v1219 = vsub.s32 0, %v1218
    %v1220 = vrot.slane %v1215, %v1219
    %v1221 = vlaneseq
    %v1222 = vshrl.u32 %v1221, 7
    %v1223 = vsub.s32 1, %v1222
    %v1224 = vrot.slane %v1215, %v1223
    %v1227 = vadd.f32 %v1199, %v1220
    %v1228 = vadd.f32 %v1200, %v1224
    %v1229 = vadd.f32 %v1201, %v1220
    %v1230 = vadd.f32 %v1202, %v1224
    %v1231 = vadd.f32 %v1203, %v1220
    %v1232 = vadd.f32 %v1204, %v1224
    %v1233 = vadd.f32 %v1205, %v1220
    %v1234 = vadd.f32 %v1206, %v1224
    %v1235 = vadd.f32 %v1207, %v1220
    %v1236 = vadd.f32 %v1208, %v1224
    %v1237 = vadd.f32 %v1209, %v1220
    %v1238 = vadd.f32 %v1210, %v1224
    %v1239 = vadd.f32 %v1211, %v1220
    %v1240 = vadd.f32 %v1212, %v1224
    %v1241 = vadd.f32 %v1213, %v1220
    %v1242 = vadd.f32 %v1214, %v1224
    %v1243 = vmax.f32 %v1227, 0.0
    %v1244 = vmax.f32 %v1228, 0.0
    %v1245 = vmax.f32 %v1229, 0.0
    %v1246 = vmax.f32 %v1230, 0.0
    %v1247 = vmax.f32 %v1231, 0.0
    %v1248 = vmax.f32 %v1232, 0.0
    %v1249 = vmax.f32 %v1233, 0.0
    %v1250 = vmax.f32 %v1234, 0.0
    %v1251 = vmax.f32 %v1235, 0.0
    %v1252 = vmax.f32 %v1236, 0.0
    %v1253 = vmax.f32 %v1237, 0.0
    %v1254 = vmax.f32 %v1238, 0.0
    %v1255 = vmax.f32 %v1239, 0.0
    %v1256 = vmax.f32 %v1240, 0.0
    %v1257 = vmax.f32 %v1241, 0.0
    %v1258 = vmax.f32 %v1242, 0.0
    %v1275 = vrot.slane %v1243, 7
    %v1276 = vrot.slane %v1244, 7
    %v1277 = vrot.slane %v1245, 7
    %v1278 = vrot.slane %v1246, 7
    %v1279 = vrot.slane %v1247, 7
    %v1280 = vrot.slane %v1248, 7
    %v1281 = vrot.slane %v1249, 7
    %v1282 = vrot.slane %v1250, 7
    %v1283 = vrot.slane %v1251, 7
    %v1284 = vrot.slane %v1252, 7
    %v1285 = vrot.slane %v1253, 7
    %v1286 = vrot.slane %v1254, 7
    %v1287 = vrot.slane %v1255, 7
    %v1288 = vrot.slane %v1256, 7
    %v1289 = vrot.slane %v1257, 7
    %v1290 = vrot.slane %v1258, 7
    %v1307 = vsel %vm116, 0.0, %v1275
    %v1308 = vsel %vm116, 0.0, %v1276
    %v1309 = vsel %vm116, 0.0, %v1277
    %v1310 = vsel %vm116, 0.0, %v1278
    %v1311 = vsel %vm116, 0.0, %v1279
    %v1312 = vsel %vm116, 0.0, %v1280
    %v1313 = vsel %vm116, 0.0, %v1281
    %v1314 = vsel %vm116, 0.0, %v1282
    %v1315 = vsel %vm116, 0.0, %v1283
    %v1316 = vsel %vm116, 0.0, %v1284
    %v1317 = vsel %vm116, 0.0, %v1285
    %v1318 = vsel %vm116, 0.0, %v1286
    %v1319 = vsel %vm116, 0.0, %v1287
    %v1320 = vsel %vm116, 0.0, %v1288
    %v1321 = vsel %vm116, 0.0, %v1289
    %v1322 = vsel %vm116, 0.0, %v1290
    %v1323 = vrot.slane %v1243, 1
    %v1324 = vrot.slane %v1244, 1
    %v1325 = vrot.slane %v1245, 1
    %v1326 = vrot.slane %v1246, 1
    %v1327 = vrot.slane %v1247, 1
    %v1328 = vrot.slane %v1248, 1
    %v1329 = vrot.slane %v1249, 1
    %v1330 = vrot.slane %v1250, 1
    %v1331 = vrot.slane %v1251, 1
    %v1332 = vrot.slane %v1252, 1
    %v1333 = vrot.slane %v1253, 1
    %v1334 = vrot.slane %v1254, 1
    %v1335 = vrot.slane %v1255, 1
    %v1336 = vrot.slane %v1256, 1
    %v1337 = vrot.slane %v1257, 1
    %v1338 = vrot.slane %v1258, 1
    %v1355 = vsel %vm165, %v1323, 0.0
    %v1356 = vsel %vm165, %v1324, 0.0
    %v1357 = vsel %vm165, %v1325, 0.0
    %v1358 = vsel %vm165, %v1326, 0.0
    %v1359 = vsel %vm165, %v1327, 0.0
    %v1360 = vsel %vm165, %v1328, 0.0
    %v1361 = vsel %vm165, %v1329, 0.0
    %v1362 = vsel %vm165, %v1330, 0.0
    %v1363 = vsel %vm165, %v1331, 0.0
    %v1364 = vsel %vm165, %v1332, 0.0
    %v1365 = vsel %vm165, %v1333, 0.0
    %v1366 = vsel %vm165, %v1334, 0.0
    %v1367 = vsel %vm165, %v1335, 0.0
    %v1368 = vsel %vm165, %v1336, 0.0
    %v1369 = vsel %vm165, %v1337, 0.0
    %v1370 = vsel %vm165, %v1338, 0.0
    %v1371 = vpack.c.bf16 %v1307, %v1307
    %v1372 = vpack.c.bf16 %v1308, %v1308
    %v1373 = vpack.c.bf16 %v1309, %v1309
    %v1374 = vpack.c.bf16 %v1310, %v1310
    %v1375 = vpack.c.bf16 %v1311, %v1311
    %v1376 = vpack.c.bf16 %v1312, %v1312
    %v1377 = vpack.c.bf16 %v1313, %v1313
    %v1378 = vpack.c.bf16 %v1314, %v1314
    %v1379 = vpack.c.bf16 %v1315, %v1315
    %v1380 = vpack.c.bf16 %v1316, %v1316
    %v1381 = vpack.c.bf16 %v1317, %v1317
    %v1382 = vpack.c.bf16 %v1318, %v1318
    %v1383 = vpack.c.bf16 %v1319, %v1319
    %v1384 = vpack.c.bf16 %v1320, %v1320
    %v1385 = vpack.c.bf16 %v1321, %v1321
    %v1386 = vpack.c.bf16 %v1322, %v1322
    %v1403 = vunpack.c.l.b16 %v1371
    %v1404 = vunpack.c.l.b16 %v1372
    %v1405 = vunpack.c.l.b16 %v1373
    %v1406 = vunpack.c.l.b16 %v1374
    %v1407 = vunpack.c.l.b16 %v1375
    %v1408 = vunpack.c.l.b16 %v1376
    %v1409 = vunpack.c.l.b16 %v1377
    %v1410 = vunpack.c.l.b16 %v1378
    %v1411 = vunpack.c.l.b16 %v1379
    %v1412 = vunpack.c.l.b16 %v1380
    %v1413 = vunpack.c.l.b16 %v1381
    %v1414 = vunpack.c.l.b16 %v1382
    %v1415 = vunpack.c.l.b16 %v1383
    %v1416 = vunpack.c.l.b16 %v1384
    %v1417 = vunpack.c.l.b16 %v1385
    %v1418 = vunpack.c.l.b16 %v1386
    %v1419 = vld [vmem:[#allocation2] sm:$0xff]
    %v1420 = vld [vmem:[#allocation2 + $0x8] sm:$0xff]
    %v1421 = vld [vmem:[#allocation2 + $0x10] sm:$0xff]
    %v1422 = vld [vmem:[#allocation2 + $0x18] sm:$0xff]
    %v1423 = vld [vmem:[#allocation2 + $0x20] sm:$0xff]
    %v1424 = vld [vmem:[#allocation2 + $0x28] sm:$0xff]
    %v1425 = vld [vmem:[#allocation2 + $0x30] sm:$0xff]
    %v1426 = vld [vmem:[#allocation2 + $0x38] sm:$0xff]
    %v1427 = vld [vmem:[#allocation2 + $0x40] sm:$0xff]
    %v1428 = vld [vmem:[#allocation2 + $0x48] sm:$0xff]
    %v1429 = vld [vmem:[#allocation2 + $0x50] sm:$0xff]
    %v1430 = vld [vmem:[#allocation2 + $0x58] sm:$0xff]
    %v1431 = vld [vmem:[#allocation2 + $0x60] sm:$0xff]
    %v1432 = vld [vmem:[#allocation2 + $0x68] sm:$0xff]
    %v1433 = vld [vmem:[#allocation2 + $0x70] sm:$0xff]
    %v1434 = vld [vmem:[#allocation2 + $0x78] sm:$0xff]
    %v1435 = vld [vmem:[#allocation2 + $0x80] sm:$0xff]
    %v1436 = vld [vmem:[#allocation2 + $0x88] sm:$0xff]
    %v1437 = vld [vmem:[#allocation2 + $0x90] sm:$0xff]
    %v1438 = vld [vmem:[#allocation2 + $0x98] sm:$0xff]
    %v1439 = vld [vmem:[#allocation2 + $0xa0] sm:$0xff]
    %v1440 = vld [vmem:[#allocation2 + $0xa8] sm:$0xff]
    %v1441 = vld [vmem:[#allocation2 + $0xb0] sm:$0xff]
    %v1442 = vld [vmem:[#allocation2 + $0xb8] sm:$0xff]
    %v1443 = vld [vmem:[#allocation2 + $0xc0] sm:$0xff]
    %v1444 = vld [vmem:[#allocation2 + $0xc8] sm:$0xff]
    %v1445 = vld [vmem:[#allocation2 + $0xd0] sm:$0xff]
    %v1446 = vld [vmem:[#allocation2 + $0xd8] sm:$0xff]
    %v1447 = vld [vmem:[#allocation2 + $0xe0] sm:$0xff]
    %v1448 = vld [vmem:[#allocation2 + $0xe8] sm:$0xff]
    %v1449 = vld [vmem:[#allocation2 + $0xf0] sm:$0xff]
    %v1450 = vld [vmem:[#allocation2 + $0xf8] sm:$0xff]
    %v1451 = vpack.c.bf16 %v1243, %v1243
    %v1452 = vpack.c.bf16 %v1244, %v1244
    %v1453 = vpack.c.bf16 %v1245, %v1245
    %v1454 = vpack.c.bf16 %v1246, %v1246
    %v1455 = vpack.c.bf16 %v1247, %v1247
    %v1456 = vpack.c.bf16 %v1248, %v1248
    %v1457 = vpack.c.bf16 %v1249, %v1249
    %v1458 = vpack.c.bf16 %v1250, %v1250
    %v1459 = vpack.c.bf16 %v1251, %v1251
    %v1460 = vpack.c.bf16 %v1252, %v1252
    %v1461 = vpack.c.bf16 %v1253, %v1253
    %v1462 = vpack.c.bf16 %v1254, %v1254
    %v1463 = vpack.c.bf16 %v1255, %v1255
    %v1464 = vpack.c.bf16 %v1256, %v1256
    %v1465 = vpack.c.bf16 %v1257, %v1257
    %v1466 = vpack.c.bf16 %v1258, %v1258
    %v1483 = vunpack.c.l.b16 %v1451
    %v1484 = vunpack.c.l.b16 %v1452
    %v1485 = vunpack.c.l.b16 %v1453
    %v1486 = vunpack.c.l.b16 %v1454
    %v1487 = vunpack.c.l.b16 %v1455
    %v1488 = vunpack.c.l.b16 %v1456
    %v1489 = vunpack.c.l.b16 %v1457
    %v1490 = vunpack.c.l.b16 %v1458
    %v1491 = vunpack.c.l.b16 %v1459
    %v1492 = vunpack.c.l.b16 %v1460
    %v1493 = vunpack.c.l.b16 %v1461
    %v1494 = vunpack.c.l.b16 %v1462
    %v1495 = vunpack.c.l.b16 %v1463
    %v1496 = vunpack.c.l.b16 %v1464
    %v1497 = vunpack.c.l.b16 %v1465
    %v1498 = vunpack.c.l.b16 %v1466
    %s1499 = scalar_lea.vmem [#allocation2], 256
    %v1500 = vld [vmem:[%s1499] sm:$0xff]
    %v1501 = vld [vmem:[%s1499 + $0x8] sm:$0xff]
    %v1502 = vld [vmem:[%s1499 + $0x10] sm:$0xff]
    %v1503 = vld [vmem:[%s1499 + $0x18] sm:$0xff]
    %v1504 = vld [vmem:[%s1499 + $0x20] sm:$0xff]
    %v1505 = vld [vmem:[%s1499 + $0x28] sm:$0xff]
    %v1506 = vld [vmem:[%s1499 + $0x30] sm:$0xff]
    %v1507 = vld [vmem:[%s1499 + $0x38] sm:$0xff]
    %v1508 = vld [vmem:[%s1499 + $0x40] sm:$0xff]
    %v1509 = vld [vmem:[%s1499 + $0x48] sm:$0xff]
    %v1510 = vld [vmem:[%s1499 + $0x50] sm:$0xff]
    %v1511 = vld [vmem:[%s1499 + $0x58] sm:$0xff]
    %v1512 = vld [vmem:[%s1499 + $0x60] sm:$0xff]
    %v1513 = vld [vmem:[%s1499 + $0x68] sm:$0xff]
    %v1514 = vld [vmem:[%s1499 + $0x70] sm:$0xff]
    %v1515 = vld [vmem:[%s1499 + $0x78] sm:$0xff]
    %v1516 = vld [vmem:[%s1499 + $0x80] sm:$0xff]
    %v1517 = vld [vmem:[%s1499 + $0x88] sm:$0xff]
    %v1518 = vld [vmem:[%s1499 + $0x90] sm:$0xff]
    %v1519 = vld [vmem:[%s1499 + $0x98] sm:$0xff]
    %v1520 = vld [vmem:[%s1499 + $0xa0] sm:$0xff]
    %v1521 = vld [vmem:[%s1499 + $0xa8] sm:$0xff]
    %v1522 = vld [vmem:[%s1499 + $0xb0] sm:$0xff]
    %v1523 = vld [vmem:[%s1499 + $0xb8] sm:$0xff]
    %v1524 = vld [vmem:[%s1499 + $0xc0] sm:$0xff]
    %v1525 = vld [vmem:[%s1499 + $0xc8] sm:$0xff]
    %v1526 = vld [vmem:[%s1499 + $0xd0] sm:$0xff]
    %v1527 = vld [vmem:[%s1499 + $0xd8] sm:$0xff]
    %v1528 = vld [vmem:[%s1499 + $0xe0] sm:$0xff]
    %v1529 = vld [vmem:[%s1499 + $0xe8] sm:$0xff]
    %v1530 = vld [vmem:[%s1499 + $0xf0] sm:$0xff]
    %v1531 = vld [vmem:[%s1499 + $0xf8] sm:$0xff]
    %v1532 = vpack.c.b16 %v1485, %v1483
    %v1533 = vpack.c.b16 %v1486, %v1484
    %v1534 = vpack.c.b16 %v1489, %v1487
    %v1535 = vpack.c.b16 %v1490, %v1488
    %v1536 = vpack.c.b16 %v1493, %v1491
    %v1537 = vpack.c.b16 %v1494, %v1492
    %v1538 = vpack.c.b16 %v1497, %v1495
    %v1539 = vpack.c.b16 %v1498, %v1496
    %v1580 = vunpack.c.l.b16 %v1500
    %v1581 = vunpack.c.h.b16 %v1500
    %v1582 = vunpack.c.l.b16 %v1501
    %v1583 = vunpack.c.h.b16 %v1501
    %v1584 = vunpack.c.l.b16 %v1502
    %v1585 = vunpack.c.h.b16 %v1502
    %v1586 = vunpack.c.l.b16 %v1503
    %v1587 = vunpack.c.h.b16 %v1503
    %v1588 = vunpack.c.l.b16 %v1504
    %v1589 = vunpack.c.h.b16 %v1504
    %v1590 = vunpack.c.l.b16 %v1505
    %v1591 = vunpack.c.h.b16 %v1505
    %v1592 = vunpack.c.l.b16 %v1506
    %v1593 = vunpack.c.h.b16 %v1506
    %v1594 = vunpack.c.l.b16 %v1507
    %v1595 = vunpack.c.h.b16 %v1507
    %v1596 = vunpack.c.l.b16 %v1508
    %v1597 = vunpack.c.h.b16 %v1508
    %v1598 = vunpack.c.l.b16 %v1509
    %v1599 = vunpack.c.h.b16 %v1509
    %v1600 = vunpack.c.l.b16 %v1510
    %v1601 = vunpack.c.h.b16 %v1510
    %v1602 = vunpack.c.l.b16 %v1511
    %v1603 = vunpack.c.h.b16 %v1511
    %v1604 = vunpack.c.l.b16 %v1512
    %v1605 = vunpack.c.h.b16 %v1512
    %v1606 = vunpack.c.l.b16 %v1513
    %v1607 = vunpack.c.h.b16 %v1513
    %v1608 = vunpack.c.l.b16 %v1514
    %v1609 = vunpack.c.h.b16 %v1514
    %v1610 = vunpack.c.l.b16 %v1515
    %v1611 = vunpack.c.h.b16 %v1515
    %v1612 = vunpack.c.l.b16 %v1516
    %v1613 = vunpack.c.h.b16 %v1516
    %v1614 = vunpack.c.l.b16 %v1517
    %v1615 = vunpack.c.h.b16 %v1517
    %v1616 = vunpack.c.l.b16 %v1518
    %v1617 = vunpack.c.h.b16 %v1518
    %v1618 = vunpack.c.l.b16 %v1519
    %v1619 = vunpack.c.h.b16 %v1519
    %v1620 = vunpack.c.l.b16 %v1520
    %v1621 = vunpack.c.h.b16 %v1520
    %v1622 = vunpack.c.l.b16 %v1521
    %v1623 = vunpack.c.h.b16 %v1521
    %v1624 = vunpack.c.l.b16 %v1522
    %v1625 = vunpack.c.h.b16 %v1522
    %v1626 = vunpack.c.l.b16 %v1523
    %v1627 = vunpack.c.h.b16 %v1523
    %v1628 = vunpack.c.l.b16 %v1524
    %v1629 = vunpack.c.h.b16 %v1524
    %v1630 = vunpack.c.l.b16 %v1525
    %v1631 = vunpack.c.h.b16 %v1525
    %v1632 = vunpack.c.l.b16 %v1526
    %v1633 = vunpack.c.h.b16 %v1526
    %v1634 = vunpack.c.l.b16 %v1527
    %v1635 = vunpack.c.h.b16 %v1527
    %v1636 = vunpack.c.l.b16 %v1528
    %v1637 = vunpack.c.h.b16 %v1528
    %v1638 = vunpack.c.l.b16 %v1529
    %v1639 = vunpack.c.h.b16 %v1529
    %v1640 = vunpack.c.l.b16 %v1530
    %v1641 = vunpack.c.h.b16 %v1530
    %v1642 = vunpack.c.l.b16 %v1531
    %v1643 = vunpack.c.h.b16 %v1531
    %v1644 = vpack.c.b16 %v1582, %v1580
    %v1645 = vpack.c.b16 %v1583, %v1581
    %v1646 = vpack.c.b16 %v1586, %v1584
    %v1647 = vpack.c.b16 %v1587, %v1585
    %v1648 = vpack.c.b16 %v1590, %v1588
    %v1649 = vpack.c.b16 %v1591, %v1589
    %v1650 = vpack.c.b16 %v1594, %v1592
    %v1651 = vpack.c.b16 %v1595, %v1593
    %v1652 = vpack.c.b16 %v1598, %v1596
    %v1653 = vpack.c.b16 %v1599, %v1597
    %v1654 = vpack.c.b16 %v1602, %v1600
    %v1655 = vpack.c.b16 %v1603, %v1601
    %v1656 = vpack.c.b16 %v1606, %v1604
    %v1657 = vpack.c.b16 %v1607, %v1605
    %v1658 = vpack.c.b16 %v1610, %v1608
    %v1659 = vpack.c.b16 %v1611, %v1609
    %v1660 = vpack.c.b16 %v1614, %v1612
    %v1661 = vpack.c.b16 %v1615, %v1613
    %v1662 = vpack.c.b16 %v1618, %v1616
    %v1663 = vpack.c.b16 %v1619, %v1617
    %v1664 = vpack.c.b16 %v1622, %v1620
    %v1665 = vpack.c.b16 %v1623, %v1621
    %v1666 = vpack.c.b16 %v1626, %v1624
    %v1667 = vpack.c.b16 %v1627, %v1625
    %v1668 = vpack.c.b16 %v1630, %v1628
    %v1669 = vpack.c.b16 %v1631, %v1629
    %v1670 = vpack.c.b16 %v1634, %v1632
    %v1671 = vpack.c.b16 %v1635, %v1633
    %v1672 = vpack.c.b16 %v1638, %v1636
    %v1673 = vpack.c.b16 %v1639, %v1637
    %v1674 = vpack.c.b16 %v1642, %v1640
    %v1675 = vpack.c.b16 %v1643, %v1641
    %1708 = vmatprep.subr.bf16.mxu0 %v1645
    %1709 = vmatpush1.bf16.msra.mxu0 %v1644
    %1710 = vmatprep.subr.bf16.mxu0 %v1647
    %1711 = vmatpush1.bf16.msra.mxu0 %v1646
    %1712 = vmatprep.subr.bf16.mxu0 %v1649
    %1713 = vmatpush1.bf16.msra.mxu0 %v1648
    %1714 = vmatprep.subr.bf16.mxu0 %v1651
    %1715 = vmatpush1.bf16.msra.mxu0 %v1650
    %1716 = vmatprep.subr.bf16.mxu0 %v1653
    %1717 = vmatpush1.bf16.msra.mxu0 %v1652
    %1718 = vmatprep.subr.bf16.mxu0 %v1655
    %1719 = vmatpush1.bf16.msra.mxu0 %v1654
    %1720 = vmatprep.subr.bf16.mxu0 %v1657
    %1721 = vmatpush1.bf16.msra.mxu0 %v1656
    %1722 = vmatprep.subr.bf16.mxu0 %v1659
    %1723 = vmatpush1.bf16.msra.mxu0 %v1658
    %1724 = vmatprep.subr.bf16.mxu0 %v1661
    %1725 = vmatpush1.bf16.msra.mxu0 %v1660
    %1726 = vmatprep.subr.bf16.mxu0 %v1663
    %1727 = vmatpush1.bf16.msra.mxu0 %v1662
    %1728 = vmatprep.subr.bf16.mxu0 %v1665
    %1729 = vmatpush1.bf16.msra.mxu0 %v1664
    %1730 = vmatprep.subr.bf16.mxu0 %v1667
    %1731 = vmatpush1.bf16.msra.mxu0 %v1666
    %1732 = vmatprep.subr.bf16.mxu0 %v1669
    %1733 = vmatpush1.bf16.msra.mxu0 %v1668
    %1734 = vmatprep.subr.bf16.mxu0 %v1671
    %1735 = vmatpush1.bf16.msra.mxu0 %v1670
    %1736 = vmatprep.subr.bf16.mxu0 %v1673
    %1737 = vmatpush1.bf16.msra.mxu0 %v1672
    %1738 = vmatprep.subr.bf16.mxu0 %v1675
    %1739 = vmatpush1.bf16.msra.mxu0 %v1674
    %1740 = vmatprep.mubr.bf16.mxu0 %v1533
    %1741 = vmatmul.mubr.bf16.gmra.mrb[0].mxu0 %v1532
    %v1742 = vpop.f32.mrb[0].mxu0
    %v1743 = vadd.f32 0.0, %v1742
    %v1744 = vpop.f32.mrb[0].mxu0
    %v1745 = vadd.f32 0.0, %v1744
    %v1746 = vpop.f32.mrb[0].mxu0
    %v1747 = vadd.f32 0.0, %v1746
    %v1748 = vpop.f32.mrb[0].mxu0
    %v1749 = vadd.f32 0.0, %v1748
    %1750 = vmatprep.mubr.bf16.mxu0 %v1535
    %1751 = vmatmul.mubr.bf16.gmra.mrb[0].mxu0 %v1534
    %v1752 = vpop.f32.mrb[0].mxu0
    %v1753 = vadd.f32 0.0, %v1752
    %v1754 = vpop.f32.mrb[0].mxu0
    %v1755 = vadd.f32 0.0, %v1754
    %v1756 = vpop.f32.mrb[0].mxu0
    %v1757 = vadd.f32 0.0, %v1756
    %v1758 = vpop.f32.mrb[0].mxu0
    %v1759 = vadd.f32 0.0, %v1758
    %1760 = vmatprep.mubr.bf16.mxu0 %v1537
    %1761 = vmatmul.mubr.bf16.gmra.mrb[0].mxu0 %v1536
    %v1762 = vpop.f32.mrb[0].mxu0
    %v1763 = vadd.f32 0.0, %v1762
    %v1764 = vpop.f32.mrb[0].mxu0
    %v1765 = vadd.f32 0.0, %v1764
    %v1766 = vpop.f32.mrb[0].mxu0
    %v1767 = vadd.f32 0.0, %v1766
    %v1768 = vpop.f32.mrb[0].mxu0
    %v1769 = vadd.f32 0.0, %v1768
    %1770 = vmatprep.mubr.bf16.mxu0 %v1539
    %1771 = vmatmul.mubr.bf16.gmra.mrb[0].mxu0 %v1538
    %v1772 = vpop.f32.mrb[0].mxu0
    %v1773 = vadd.f32 0.0, %v1772
    %v1774 = vpop.f32.mrb[0].mxu0
    %v1775 = vadd.f32 0.0, %v1774
    %v1776 = vpop.f32.mrb[0].mxu0
    %v1777 = vadd.f32 0.0, %v1776
    %v1778 = vpop.f32.mrb[0].mxu0
    %v1779 = vadd.f32 0.0, %v1778
    %1780 = vdwg.mxu0
    %v1781 = vpack.c.b16 %v1405, %v1403
    %v1782 = vpack.c.b16 %v1406, %v1404
    %v1783 = vpack.c.b16 %v1409, %v1407
    %v1784 = vpack.c.b16 %v1410, %v1408
    %v1785 = vpack.c.b16 %v1413, %v1411
    %v1786 = vpack.c.b16 %v1414, %v1412
    %v1787 = vpack.c.b16 %v1417, %v1415
    %v1788 = vpack.c.b16 %v1418, %v1416
    %v1829 = vunpack.c.l.b16 %v1419
    %v1830 = vunpack.c.h.b16 %v1419
    %v1831 = vunpack.c.l.b16 %v1420
    %v1832 = vunpack.c.h.b16 %v1420
    %v1833 = vunpack.c.l.b16 %v1421
    %v1834 = vunpack.c.h.b16 %v1421
    %v1835 = vunpack.c.l.b16 %v1422
    %v1836 = vunpack.c.h.b16 %v1422
    %v1837 = vunpack.c.l.b16 %v1423
    %v1838 = vunpack.c.h.b16 %v1423
    %v1839 = vunpack.c.l.b16 %v1424
    %v1840 = vunpack.c.h.b16 %v1424
    %v1841 = vunpack.c.l.b16 %v1425
    %v1842 = vunpack.c.h.b16 %v1425
    %v1843 = vunpack.c.l.b16 %v1426
    %v1844 = vunpack.c.h.b16 %v1426
    %v1845 = vunpack.c.l.b16 %v1427
    %v1846 = vunpack.c.h.b16 %v1427
    %v1847 = vunpack.c.l.b16 %v1428
    %v1848 = vunpack.c.h.b16 %v1428
    %v1849 = vunpack.c.l.b16 %v1429
    %v1850 = vunpack.c.h.b16 %v1429
    %v1851 = vunpack.c.l.b16 %v1430
    %v1852 = vunpack.c.h.b16 %v1430
    %v1853 = vunpack.c.l.b16 %v1431
    %v1854 = vunpack.c.h.b16 %v1431
    %v1855 = vunpack.c.l.b16 %v1432
    %v1856 = vunpack.c.h.b16 %v1432
    %v1857 = vunpack.c.l.b16 %v1433
    %v1858 = vunpack.c.h.b16 %v1433
    %v1859 = vunpack.c.l.b16 %v1434
    %v1860 = vunpack.c.h.b16 %v1434
    %v1861 = vunpack.c.l.b16 %v1435
    %v1862 = vunpack.c.h.b16 %v1435
    %v1863 = vunpack.c.l.b16 %v1436
    %v1864 = vunpack.c.h.b16 %v1436
    %v1865 = vunpack.c.l.b16 %v1437
    %v1866 = vunpack.c.h.b16 %v1437
    %v1867 = vunpack.c.l.b16 %v1438
    %v1868 = vunpack.c.h.b16 %v1438
    %v1869 = vunpack.c.l.b16 %v1439
    %v1870 = vunpack.c.h.b16 %v1439
    %v1871 = vunpack.c.l.b16 %v1440
    %v1872 = vunpack.c.h.b16 %v1440
    %v1873 = vunpack.c.l.b16 %v1441
    %v1874 = vunpack.c.h.b16 %v1441
    %v1875 = vunpack.c.l.b16 %v1442
    %v1876 = vunpack.c.h.b16 %v1442
    %v1877 = vunpack.c.l.b16 %v1443
    %v1878 = vunpack.c.h.b16 %v1443
    %v1879 = vunpack.c.l.b16 %v1444
    %v1880 = vunpack.c.h.b16 %v1444
    %v1881 = vunpack.c.l.b16 %v1445
    %v1882 = vunpack.c.h.b16 %v1445
    %v1883 = vunpack.c.l.b16 %v1446
    %v1884 = vunpack.c.h.b16 %v1446
    %v1885 = vunpack.c.l.b16 %v1447
    %v1886 = vunpack.c.h.b16 %v1447
    %v1887 = vunpack.c.l.b16 %v1448
    %v1888 = vunpack.c.h.b16 %v1448
    %v1889 = vunpack.c.l.b16 %v1449
    %v1890 = vunpack.c.h.b16 %v1449
    %v1891 = vunpack.c.l.b16 %v1450
    %v1892 = vunpack.c.h.b16 %v1450
    %v1893 = vpack.c.b16 %v1831, %v1829
    %v1894 = vpack.c.b16 %v1832, %v1830
    %v1895 = vpack.c.b16 %v1835, %v1833
    %v1896 = vpack.c.b16 %v1836, %v1834
    %v1897 = vpack.c.b16 %v1839, %v1837
    %v1898 = vpack.c.b16 %v1840, %v1838
    %v1899 = vpack.c.b16 %v1843, %v1841
    %v1900 = vpack.c.b16 %v1844, %v1842
    %v1901 = vpack.c.b16 %v1847, %v1845
    %v1902 = vpack.c.b16 %v1848, %v1846
    %v1903 = vpack.c.b16 %v1851, %v1849
    %v1904 = vpack.c.b16 %v1852, %v1850
    %v1905 = vpack.c.b16 %v1855, %v1853
    %v1906 = vpack.c.b16 %v1856, %v1854
    %v1907 = vpack.c.b16 %v1859, %v1857
    %v1908 = vpack.c.b16 %v1860, %v1858
    %v1909 = vpack.c.b16 %v1863, %v1861
    %v1910 = vpack.c.b16 %v1864, %v1862
    %v1911 = vpack.c.b16 %v1867, %v1865
    %v1912 = vpack.c.b16 %v1868, %v1866
    %v1913 = vpack.c.b16 %v1871, %v1869
    %v1914 = vpack.c.b16 %v1872, %v1870
    %v1915 = vpack.c.b16 %v1875, %v1873
    %v1916 = vpack.c.b16 %v1876, %v1874
    %v1917 = vpack.c.b16 %v1879, %v1877
    %v1918 = vpack.c.b16 %v1880, %v1878
    %v1919 = vpack.c.b16 %v1883, %v1881
    %v1920 = vpack.c.b16 %v1884, %v1882
    %v1921 = vpack.c.b16 %v1887, %v1885
    %v1922 = vpack.c.b16 %v1888, %v1886
    %v1923 = vpack.c.b16 %v1891, %v1889
    %v1924 = vpack.c.b16 %v1892, %v1890
    %1957 = vmatprep.subr.bf16.mxu0 %v1894
    %1958 = vmatpush1.bf16.msra.mxu0 %v1893
    %1959 = vmatprep.subr.bf16.mxu0 %v1896
    %1960 = vmatpush1.bf16.msra.mxu0 %v1895
    %1961 = vmatprep.subr.bf16.mxu0 %v1898
    %1962 = vmatpush1.bf16.msra.mxu0 %v1897
    %1963 = vmatprep.subr.bf16.mxu0 %v1900
    %1964 = vmatpush1.bf16.msra.mxu0 %v1899
    %1965 = vmatprep.subr.bf16.mxu0 %v1902
    %1966 = vmatpush1.bf16.msra.mxu0 %v1901
    %1967 = vmatprep.subr.bf16.mxu0 %v1904
    %1968 = vmatpush1.bf16.msra.mxu0 %v1903
    %1969 = vmatprep.subr.bf16.mxu0 %v1906
    %1970 = vmatpush1.bf16.msra.mxu0 %v1905
    %1971 = vmatprep.subr.bf16.mxu0 %v1908
    %1972 = vmatpush1.bf16.msra.mxu0 %v1907
    %1973 = vmatprep.subr.bf16.mxu0 %v1910
    %1974 = vmatpush1.bf16.msra.mxu0 %v1909
    %1975 = vmatprep.subr.bf16.mxu0 %v1912
    %1976 = vmatpush1.bf16.msra.mxu0 %v1911
    %1977 = vmatprep.subr.bf16.mxu0 %v1914
    %1978 = vmatpush1.bf16.msra.mxu0 %v1913
    %1979 = vmatprep.subr.bf16.mxu0 %v1916
    %1980 = vmatpush1.bf16.msra.mxu0 %v1915
    %1981 = vmatprep.subr.bf16.mxu0 %v1918
    %1982 = vmatpush1.bf16.msra.mxu0 %v1917
    %1983 = vmatprep.subr.bf16.mxu0 %v1920
    %1984 = vmatpush1.bf16.msra.mxu0 %v1919
    %1985 = vmatprep.subr.bf16.mxu0 %v1922
    %1986 = vmatpush1.bf16.msra.mxu0 %v1921
    %1987 = vmatprep.subr.bf16.mxu0 %v1924
    %1988 = vmatpush1.bf16.msra.mxu0 %v1923
    %1989 = vmatprep.mubr.bf16.mxu0 %v1782
    %1990 = vmatmul.mubr.bf16.gmra.mrb[0].mxu0 %v1781
    %v1991 = vpop.f32.mrb[0].mxu0
    %v1992 = vadd.f32 %v1743, %v1991
    %v1993 = vpop.f32.mrb[0].mxu0
    %v1994 = vadd.f32 %v1745, %v1993
    %v1995 = vpop.f32.mrb[0].mxu0
    %v1996 = vadd.f32 %v1747, %v1995
    %v1997 = vpop.f32.mrb[0].mxu0
    %v1998 = vadd.f32 %v1749, %v1997
    %1999 = vmatprep.mubr.bf16.mxu0 %v1784
    %2000 = vmatmul.mubr.bf16.gmra.mrb[0].mxu0 %v1783
    %v2001 = vpop.f32.mrb[0].mxu0
    %v2002 = vadd.f32 %v1753, %v2001
    %v2003 = vpop.f32.mrb[0].mxu0
    %v2004 = vadd.f32 %v1755, %v2003
    %v2005 = vpop.f32.mrb[0].mxu0
    %v2006 = vadd.f32 %v1757, %v2005
    %v2007 = vpop.f32.mrb[0].mxu0
    %v2008 = vadd.f32 %v1759, %v2007
    %2009 = vmatprep.mubr.bf16.mxu0 %v1786
    %2010 = vmatmul.mubr.bf16.gmra.mrb[0].mxu0 %v1785
    %v2011 = vpop.f32.mrb[0].mxu0
    %v2012 = vadd.f32 %v1763, %v2011
    %v2013 = vpop.f32.mrb[0].mxu0
    %v2014 = vadd.f32 %v1765, %v2013
    %v2015 = vpop.f32.mrb[0].mxu0
    %v2016 = vadd.f32 %v1767, %v2015
    %v2017 = vpop.f32.mrb[0].mxu0
    %v2018 = vadd.f32 %v1769, %v2017
    %2019 = vmatprep.mubr.bf16.mxu0 %v1788
    %2020 = vmatmul.mubr.bf16.gmra.mrb[0].mxu0 %v1787
    %v2021 = vpop.f32.mrb[0].mxu0
    %v2022 = vadd.f32 %v1773, %v2021
    %v2023 = vpop.f32.mrb[0].mxu0
    %v2024 = vadd.f32 %v1775, %v2023
    %v2025 = vpop.f32.mrb[0].mxu0
    %v2026 = vadd.f32 %v1777, %v2025
    %v2027 = vpop.f32.mrb[0].mxu0
    %v2028 = vadd.f32 %v1779, %v2027
    %2029 = vdwg.mxu0
    %v2030 = vpack.c.bf16 %v1355, %v1355
    %v2031 = vpack.c.bf16 %v1356, %v1356
    %v2032 = vpack.c.bf16 %v1357, %v1357
    %v2033 = vpack.c.bf16 %v1358, %v1358
    %v2034 = vpack.c.bf16 %v1359, %v1359
    %v2035 = vpack.c.bf16 %v1360, %v1360
    %v2036 = vpack.c.bf16 %v1361, %v1361
    %v2037 = vpack.c.bf16 %v1362, %v1362
    %v2038 = vpack.c.bf16 %v1363, %v1363
    %v2039 = vpack.c.bf16 %v1364, %v1364
    %v2040 = vpack.c.bf16 %v1365, %v1365
    %v2041 = vpack.c.bf16 %v1366, %v1366
    %v2042 = vpack.c.bf16 %v1367, %v1367
    %v2043 = vpack.c.bf16 %v1368, %v1368
    %v2044 = vpack.c.bf16 %v1369, %v1369
    %v2045 = vpack.c.bf16 %v1370, %v1370
    %v2062 = vunpack.c.l.b16 %v2030
    %v2063 = vunpack.c.l.b16 %v2031
    %v2064 = vunpack.c.l.b16 %v2032
    %v2065 = vunpack.c.l.b16 %v2033
    %v2066 = vunpack.c.l.b16 %v2034
    %v2067 = vunpack.c.l.b16 %v2035
    %v2068 = vunpack.c.l.b16 %v2036
    %v2069 = vunpack.c.l.b16 %v2037
    %v2070 = vunpack.c.l.b16 %v2038
    %v2071 = vunpack.c.l.b16 %v2039
    %v2072 = vunpack.c.l.b16 %v2040
    %v2073 = vunpack.c.l.b16 %v2041
    %v2074 = vunpack.c.l.b16 %v2042
    %v2075 = vunpack.c.l.b16 %v2043
    %v2076 = vunpack.c.l.b16 %v2044
    %v2077 = vunpack.c.l.b16 %v2045
    %s2078 = scalar_lea.vmem [#allocation2], 512
    %v2079 = vld [vmem:[%s2078] sm:$0xff]
    %v2080 = vld [vmem:[%s2078 + $0x8] sm:$0xff]
    %v2081 = vld [vmem:[%s2078 + $0x10] sm:$0xff]
    %v2082 = vld [vmem:[%s2078 + $0x18] sm:$0xff]
    %v2083 = vld [vmem:[%s2078 + $0x20] sm:$0xff]
    %v2084 = vld [vmem:[%s2078 + $0x28] sm:$0xff]
    %v2085 = vld [vmem:[%s2078 + $0x30] sm:$0xff]
    %v2086 = vld [vmem:[%s2078 + $0x38] sm:$0xff]
    %v2087 = vld [vmem:[%s2078 + $0x40] sm:$0xff]
    %v2088 = vld [vmem:[%s2078 + $0x48] sm:$0xff]
    %v2089 = vld [vmem:[%s2078 + $0x50] sm:$0xff]
    %v2090 = vld [vmem:[%s2078 + $0x58] sm:$0xff]
    %v2091 = vld [vmem:[%s2078 + $0x60] sm:$0xff]
    %v2092 = vld [vmem:[%s2078 + $0x68] sm:$0xff]
    %v2093 = vld [vmem:[%s2078 + $0x70] sm:$0xff]
    %v2094 = vld [vmem:[%s2078 + $0x78] sm:$0xff]
    %v2095 = vld [vmem:[%s2078 + $0x80] sm:$0xff]
    %v2096 = vld [vmem:[%s2078 + $0x88] sm:$0xff]
    %v2097 = vld [vmem:[%s2078 + $0x90] sm:$0xff]
    %v2098 = vld [vmem:[%s2078 + $0x98] sm:$0xff]
    %v2099 = vld [vmem:[%s2078 + $0xa0] sm:$0xff]
    %v2100 = vld [vmem:[%s2078 + $0xa8] sm:$0xff]
    %v2101 = vld [vmem:[%s2078 + $0xb0] sm:$0xff]
    %v2102 = vld [vmem:[%s2078 + $0xb8] sm:$0xff]
    %v2103 = vld [vmem:[%s2078 + $0xc0] sm:$0xff]
    %v2104 = vld [vmem:[%s2078 + $0xc8] sm:$0xff]
    %v2105 = vld [vmem:[%s2078 + $0xd0] sm:$0xff]
    %v2106 = vld [vmem:[%s2078 + $0xd8] sm:$0xff]
    %v2107 = vld [vmem:[%s2078 + $0xe0] sm:$0xff]
    %v2108 = vld [vmem:[%s2078 + $0xe8] sm:$0xff]
    %v2109 = vld [vmem:[%s2078 + $0xf0] sm:$0xff]
    %v2110 = vld [vmem:[%s2078 + $0xf8] sm:$0xff]
    %v2111 = vpack.c.b16 %v2064, %v2062
    %v2112 = vpack.c.b16 %v2065, %v2063
    %v2113 = vpack.c.b16 %v2068, %v2066
    %v2114 = vpack.c.b16 %v2069, %v2067
    %v2115 = vpack.c.b16 %v2072, %v2070
    %v2116 = vpack.c.b16 %v2073, %v2071
    %v2117 = vpack.c.b16 %v2076, %v2074
    %v2118 = vpack.c.b16 %v2077, %v2075
    %v2159 = vunpack.c.l.b16 %v2079
    %v2160 = vunpack.c.h.b16 %v2079
    %v2161 = vunpack.c.l.b16 %v2080
    %v2162 = vunpack.c.h.b16 %v2080
    %v2163 = vunpack.c.l.b16 %v2081
    %v2164 = vunpack.c.h.b16 %v2081
    %v2165 = vunpack.c.l.b16 %v2082
    %v2166 = vunpack.c.h.b16 %v2082
    %v2167 = vunpack.c.l.b16 %v2083
    %v2168 = vunpack.c.h.b16 %v2083
    %v2169 = vunpack.c.l.b16 %v2084
    %v2170 = vunpack.c.h.b16 %v2084
    %v2171 = vunpack.c.l.b16 %v2085
    %v2172 = vunpack.c.h.b16 %v2085
    %v2173 = vunpack.c.l.b16 %v2086
    %v2174 = vunpack.c.h.b16 %v2086
    %v2175 = vunpack.c.l.b16 %v2087
    %v2176 = vunpack.c.h.b16 %v2087
    %v2177 = vunpack.c.l.b16 %v2088
    %v2178 = vunpack.c.h.b16 %v2088
    %v2179 = vunpack.c.l.b16 %v2089
    %v2180 = vunpack.c.h.b16 %v2089
    %v2181 = vunpack.c.l.b16 %v2090
    %v2182 = vunpack.c.h.b16 %v2090
    %v2183 = vunpack.c.l.b16 %v2091
    %v2184 = vunpack.c.h.b16 %v2091
    %v2185 = vunpack.c.l.b16 %v2092
    %v2186 = vunpack.c.h.b16 %v2092
    %v2187 = vunpack.c.l.b16 %v2093
    %v2188 = vunpack.c.h.b16 %v2093
    %v2189 = vunpack.c.l.b16 %v2094
    %v2190 = vunpack.c.h.b16 %v2094
    %v2191 = vunpack.c.l.b16 %v2095
    %v2192 = vunpack.c.h.b16 %v2095
    %v2193 = vunpack.c.l.b16 %v2096
    %v2194 = vunpack.c.h.b16 %v2096
    %v2195 = vunpack.c.l.b16 %v2097
    %v2196 = vunpack.c.h.b16 %v2097
    %v2197 = vunpack.c.l.b16 %v2098
    %v2198 = vunpack.c.h.b16 %v2098
    %v2199 = vunpack.c.l.b16 %v2099
    %v2200 = vunpack.c.h.b16 %v2099
    %v2201 = vunpack.c.l.b16 %v2100
    %v2202 = vunpack.c.h.b16 %v2100
    %v2203 = vunpack.c.l.b16 %v2101
    %v2204 = vunpack.c.h.b16 %v2101
    %v2205 = vunpack.c.l.b16 %v2102
    %v2206 = vunpack.c.h.b16 %v2102
    %v2207 = vunpack.c.l.b16 %v2103
    %v2208 = vunpack.c.h.b16 %v2103
    %v2209 = vunpack.c.l.b16 %v2104
    %v2210 = vunpack.c.h.b16 %v2104
    %v2211 = vunpack.c.l.b16 %v2105
    %v2212 = vunpack.c.h.b16 %v2105
    %v2213 = vunpack.c.l.b16 %v2106
    %v2214 = vunpack.c.h.b16 %v2106
    %v2215 = vunpack.c.l.b16 %v2107
    %v2216 = vunpack.c.h.b16 %v2107
    %v2217 = vunpack.c.l.b16 %v2108
    %v2218 = vunpack.c.h.b16 %v2108
    %v2219 = vunpack.c.l.b16 %v2109
    %v2220 = vunpack.c.h.b16 %v2109
    %v2221 = vunpack.c.l.b16 %v2110
    %v2222 = vunpack.c.h.b16 %v2110
    %v2223 = vpack.c.b16 %v2161, %v2159
    %v2224 = vpack.c.b16 %v2162, %v2160
    %v2225 = vpack.c.b16 %v2165, %v2163
    %v2226 = vpack.c.b16 %v2166, %v2164
    %v2227 = vpack.c.b16 %v2169, %v2167
    %v2228 = vpack.c.b16 %v2170, %v2168
    %v2229 = vpack.c.b16 %v2173, %v2171
    %v2230 = vpack.c.b16 %v2174, %v2172
    %v2231 = vpack.c.b16 %v2177, %v2175
    %v2232 = vpack.c.b16 %v2178, %v2176
    %v2233 = vpack.c.b16 %v2181, %v2179
    %v2234 = vpack.c.b16 %v2182, %v2180
    %v2235 = vpack.c.b16 %v2185, %v2183
    %v2236 = vpack.c.b16 %v2186, %v2184
    %v2237 = vpack.c.b16 %v2189, %v2187
    %v2238 = vpack.c.b16 %v2190, %v2188
    %v2239 = vpack.c.b16 %v2193, %v2191
    %v2240 = vpack.c.b16 %v2194, %v2192
    %v2241 = vpack.c.b16 %v2197, %v2195
    %v2242 = vpack.c.b16 %v2198, %v2196
    %v2243 = vpack.c.b16 %v2201, %v2199
    %v2244 = vpack.c.b16 %v2202, %v2200
    %v2245 = vpack.c.b16 %v2205, %v2203
    %v2246 = vpack.c.b16 %v2206, %v2204
    %v2247 = vpack.c.b16 %v2209, %v2207
    %v2248 = vpack.c.b16 %v2210, %v2208
    %v2249 = vpack.c.b16 %v2213, %v2211
    %v2250 = vpack.c.b16 %v2214, %v2212
    %v2251 = vpack.c.b16 %v2217, %v2215
    %v2252 = vpack.c.b16 %v2218, %v2216
    %v2253 = vpack.c.b16 %v2221, %v2219
    %v2254 = vpack.c.b16 %v2222, %v2220
    %2287 = vmatprep.subr.bf16.mxu0 %v2224
    %2288 = vmatpush1.bf16.msra.mxu0 %v2223
    %2289 = vmatprep.subr.bf16.mxu0 %v2226
    %2290 = vmatpush1.bf16.msra.mxu0 %v2225
    %2291 = vmatprep.subr.bf16.mxu0 %v2228
    %2292 = vmatpush1.bf16.msra.mxu0 %v2227
    %2293 = vmatprep.subr.bf16.mxu0 %v2230
    %2294 = vmatpush1.bf16.msra.mxu0 %v2229
    %2295 = vmatprep.subr.bf16.mxu0 %v2232
    %2296 = vmatpush1.bf16.msra.mxu0 %v2231
    %2297 = vmatprep.subr.bf16.mxu0 %v2234
    %2298 = vmatpush1.bf16.msra.mxu0 %v2233
    %2299 = vmatprep.subr.bf16.mxu0 %v2236
    %2300 = vmatpush1.bf16.msra.mxu0 %v2235
    %2301 = vmatprep.subr.bf16.mxu0 %v2238
    %2302 = vmatpush1.bf16.msra.mxu0 %v2237
    %2303 = vmatprep.subr.bf16.mxu0 %v2240
    %2304 = vmatpush1.bf16.msra.mxu0 %v2239
    %2305 = vmatprep.subr.bf16.mxu0 %v2242
    %2306 = vmatpush1.bf16.msra.mxu0 %v2241
    %2307 = vmatprep.subr.bf16.mxu0 %v2244
    %2308 = vmatpush1.bf16.msra.mxu0 %v2243
    %2309 = vmatprep.subr.bf16.mxu0 %v2246
    %2310 = vmatpush1.bf16.msra.mxu0 %v2245
    %2311 = vmatprep.subr.bf16.mxu0 %v2248
    %2312 = vmatpush1.bf16.msra.mxu0 %v2247
    %2313 = vmatprep.subr.bf16.mxu0 %v2250
    %2314 = vmatpush1.bf16.msra.mxu0 %v2249
    %2315 = vmatprep.subr.bf16.mxu0 %v2252
    %2316 = vmatpush1.bf16.msra.mxu0 %v2251
    %2317 = vmatprep.subr.bf16.mxu0 %v2254
    %2318 = vmatpush1.bf16.msra.mxu0 %v2253
    %2319 = vmatprep.mubr.bf16.mxu0 %v2112
    %2320 = vmatmul.mubr.bf16.gmra.mrb[0].mxu0 %v2111
    %v2321 = vpop.f32.mrb[0].mxu0
    %v2322 = vadd.f32 0.0, %v2321
    %v2323 = vpop.f32.mrb[0].mxu0
    %v2324 = vadd.f32 0.0, %v2323
    %v2325 = vpop.f32.mrb[0].mxu0
    %v2326 = vadd.f32 0.0, %v2325
    %v2327 = vpop.f32.mrb[0].mxu0
    %v2328 = vadd.f32 0.0, %v2327
    %2329 = vmatprep.mubr.bf16.mxu0 %v2114
    %2330 = vmatmul.mubr.bf16.gmra.mrb[0].mxu0 %v2113
    %v2331 = vpop.f32.mrb[0].mxu0
    %v2332 = vadd.f32 0.0, %v2331
    %v2333 = vpop.f32.mrb[0].mxu0
    %v2334 = vadd.f32 0.0, %v2333
    %v2335 = vpop.f32.mrb[0].mxu0
    %v2336 = vadd.f32 0.0, %v2335
    %v2337 = vpop.f32.mrb[0].mxu0
    %v2338 = vadd.f32 0.0, %v2337
    %2339 = vmatprep.mubr.bf16.mxu0 %v2116
    %2340 = vmatmul.mubr.bf16.gmra.mrb[0].mxu0 %v2115
    %v2341 = vpop.f32.mrb[0].mxu0
    %v2342 = vadd.f32 0.0, %v2341
    %v2343 = vpop.f32.mrb[0].mxu0
    %v2344 = vadd.f32 0.0, %v2343
    %v2345 = vpop.f32.mrb[0].mxu0
    %v2346 = vadd.f32 0.0, %v2345
    %v2347 = vpop.f32.mrb[0].mxu0
    %v2348 = vadd.f32 0.0, %v2347
    %2349 = vmatprep.mubr.bf16.mxu0 %v2118
    %2350 = vmatmul.mubr.bf16.gmra.mrb[0].mxu0 %v2117
    %v2351 = vpop.f32.mrb[0].mxu0
    %v2352 = vadd.f32 0.0, %v2351
    %v2353 = vpop.f32.mrb[0].mxu0
    %v2354 = vadd.f32 0.0, %v2353
    %v2355 = vpop.f32.mrb[0].mxu0
    %v2356 = vadd.f32 0.0, %v2355
    %v2357 = vpop.f32.mrb[0].mxu0
    %v2358 = vadd.f32 0.0, %v2357
    %2359 = vdwg.mxu0
    %v2360 = vadd.f32 %v1992, %v2322
    %v2361 = vadd.f32 %v1994, %v2324
    %v2362 = vadd.f32 %v1996, %v2326
    %v2363 = vadd.f32 %v1998, %v2328
    %v2364 = vadd.f32 %v2002, %v2332
    %v2365 = vadd.f32 %v2004, %v2334
    %v2366 = vadd.f32 %v2006, %v2336
    %v2367 = vadd.f32 %v2008, %v2338
    %v2368 = vadd.f32 %v2012, %v2342
    %v2369 = vadd.f32 %v2014, %v2344
    %v2370 = vadd.f32 %v2016, %v2346
    %v2371 = vadd.f32 %v2018, %v2348
    %v2372 = vadd.f32 %v2022, %v2352
    %v2373 = vadd.f32 %v2024, %v2354
    %v2374 = vadd.f32 %v2026, %v2356
    %v2375 = vadd.f32 %v2028, %v2358
    %v2376 = vld [vmem:[%s5] sm:$0x3]
    %v2378 = vlaneseq
    %v2379 = vshrl.u32 %v2378, 7
    %v2380 = vsub.s32 0, %v2379
    %v2381 = vrot.slane %v2376, %v2380
    %v2382 = vlaneseq
    %v2383 = vshrl.u32 %v2382, 7
    %v2384 = vsub.s32 1, %v2383
    %v2385 = vrot.slane %v2376, %v2384
    %v2388 = vmul.f32 %v2360, %v2381
    %v2389 = vmul.f32 %v2361, %v2385
    %v2390 = vmul.f32 %v2362, %v2381
    %v2391 = vmul.f32 %v2363, %v2385
    %v2392 = vmul.f32 %v2364, %v2381
    %v2393 = vmul.f32 %v2365, %v2385
    %v2394 = vmul.f32 %v2366, %v2381
    %v2395 = vmul.f32 %v2367, %v2385
    %v2396 = vmul.f32 %v2368, %v2381
    %v2397 = vmul.f32 %v2369, %v2385
    %v2398 = vmul.f32 %v2370, %v2381
    %v2399 = vmul.f32 %v2371, %v2385
    %v2400 = vmul.f32 %v2372, %v2381
    %v2401 = vmul.f32 %v2373, %v2385
    %v2402 = vmul.f32 %v2374, %v2381
    %v2403 = vmul.f32 %v2375, %v2385
    %v2404 = vld [vmem:[%s6] sm:$0x3]
    %v2406 = vlaneseq
    %v2407 = vshrl.u32 %v2406, 7
    %v2408 = vsub.s32 0, %v2407
    %v2409 = vrot.slane %v2404, %v2408
    %v2410 = vlaneseq
    %v2411 = vshrl.u32 %v2410, 7
    %v2412 = vsub.s32 1, %v2411
    %v2413 = vrot.slane %v2404, %v2412
    %v2416 = vadd.f32 %v2388, %v2409
    %v2417 = vadd.f32 %v2389, %v2413
    %v2418 = vadd.f32 %v2390, %v2409
    %v2419 = vadd.f32 %v2391, %v2413
    %v2420 = vadd.f32 %v2392, %v2409
    %v2421 = vadd.f32 %v2393, %v2413
    %v2422 = vadd.f32 %v2394, %v2409
    %v2423 = vadd.f32 %v2395, %v2413
    %v2424 = vadd.f32 %v2396, %v2409
    %v2425 = vadd.f32 %v2397, %v2413
    %v2426 = vadd.f32 %v2398, %v2409
    %v2427 = vadd.f32 %v2399, %v2413
    %v2428 = vadd.f32 %v2400, %v2409
    %v2429 = vadd.f32 %v2401, %v2413
    %v2430 = vadd.f32 %v2402, %v2409
    %v2431 = vadd.f32 %v2403, %v2413
    %v2432 = vrot.slane %v2416, 4
    %v2433 = vadd.f32 %v2416, %v2432
    %v2434 = vrot.slane %v2433, 2
    %v2435 = vadd.f32 %v2433, %v2434
    %v2436 = vrot.slane %v2435, 1
    %v2437 = vadd.f32 %v2435, %v2436
    %v2438 = vrot.slane %v2417, 4
    %v2439 = vadd.f32 %v2417, %v2438
    %v2440 = vrot.slane %v2439, 2
    %v2441 = vadd.f32 %v2439, %v2440
    %v2442 = vrot.slane %v2441, 1
    %v2443 = vadd.f32 %v2441, %v2442
    %v2444 = vrot.slane %v2418, 4
    %v2445 = vadd.f32 %v2418, %v2444
    %v2446 = vrot.slane %v2445, 2
    %v2447 = vadd.f32 %v2445, %v2446
    %v2448 = vrot.slane %v2447, 1
    %v2449 = vadd.f32 %v2447, %v2448
    %v2450 = vrot.slane %v2419, 4
    %v2451 = vadd.f32 %v2419, %v2450
    %v2452 = vrot.slane %v2451, 2
    %v2453 = vadd.f32 %v2451, %v2452
    %v2454 = vrot.slane %v2453, 1
    %v2455 = vadd.f32 %v2453, %v2454
    %v2456 = vrot.slane %v2420, 4
    %v2457 = vadd.f32 %v2420, %v2456
    %v2458 = vrot.slane %v2457, 2
    %v2459 = vadd.f32 %v2457, %v2458
    %v2460 = vrot.slane %v2459, 1
    %v2461 = vadd.f32 %v2459, %v2460
    %v2462 = vrot.slane %v2421, 4
    %v2463 = vadd.f32 %v2421, %v2462
    %v2464 = vrot.slane %v2463, 2
    %v2465 = vadd.f32 %v2463, %v2464
    %v2466 = vrot.slane %v2465, 1
    %v2467 = vadd.f32 %v2465, %v2466
    %v2468 = vrot.slane %v2422, 4
    %v2469 = vadd.f32 %v2422, %v2468
    %v2470 = vrot.slane %v2469, 2
    %v2471 = vadd.f32 %v2469, %v2470
    %v2472 = vrot.slane %v2471, 1
    %v2473 = vadd.f32 %v2471, %v2472
    %v2474 = vrot.slane %v2423, 4
    %v2475 = vadd.f32 %v2423, %v2474
    %v2476 = vrot.slane %v2475, 2
    %v2477 = vadd.f32 %v2475, %v2476
    %v2478 = vrot.slane %v2477, 1
    %v2479 = vadd.f32 %v2477, %v2478
    %v2480 = vrot.slane %v2424, 4
    %v2481 = vadd.f32 %v2424, %v2480
    %v2482 = vrot.slane %v2481, 2
    %v2483 = vadd.f32 %v2481, %v2482
    %v2484 = vrot.slane %v2483, 1
    %v2485 = vadd.f32 %v2483, %v2484
    %v2486 = vrot.slane %v2425, 4
    %v2487 = vadd.f32 %v2425, %v2486
    %v2488 = vrot.slane %v2487, 2
    %v2489 = vadd.f32 %v2487, %v2488
    %v2490 = vrot.slane %v2489, 1
    %v2491 = vadd.f32 %v2489, %v2490
    %v2492 = vrot.slane %v2426, 4
    %v2493 = vadd.f32 %v2426, %v2492
    %v2494 = vrot.slane %v2493, 2
    %v2495 = vadd.f32 %v2493, %v2494
    %v2496 = vrot.slane %v2495, 1
    %v2497 = vadd.f32 %v2495, %v2496
    %v2498 = vrot.slane %v2427, 4
    %v2499 = vadd.f32 %v2427, %v2498
    %v2500 = vrot.slane %v2499, 2
    %v2501 = vadd.f32 %v2499, %v2500
    %v2502 = vrot.slane %v2501, 1
    %v2503 = vadd.f32 %v2501, %v2502
    %v2504 = vrot.slane %v2428, 4
    %v2505 = vadd.f32 %v2428, %v2504
    %v2506 = vrot.slane %v2505, 2
    %v2507 = vadd.f32 %v2505, %v2506
    %v2508 = vrot.slane %v2507, 1
    %v2509 = vadd.f32 %v2507, %v2508
    %v2510 = vrot.slane %v2429, 4
    %v2511 = vadd.f32 %v2429, %v2510
    %v2512 = vrot.slane %v2511, 2
    %v2513 = vadd.f32 %v2511, %v2512
    %v2514 = vrot.slane %v2513, 1
    %v2515 = vadd.f32 %v2513, %v2514
    %v2516 = vrot.slane %v2430, 4
    %v2517 = vadd.f32 %v2430, %v2516
    %v2518 = vrot.slane %v2517, 2
    %v2519 = vadd.f32 %v2517, %v2518
    %v2520 = vrot.slane %v2519, 1
    %v2521 = vadd.f32 %v2519, %v2520
    %v2522 = vrot.slane %v2431, 4
    %v2523 = vadd.f32 %v2431, %v2522
    %v2524 = vrot.slane %v2523, 2
    %v2525 = vadd.f32 %v2523, %v2524
    %v2526 = vrot.slane %v2525, 1
    %v2527 = vadd.f32 %v2525, %v2526
    %v2528 = vld [vmem:[%s7] sm:$0xff]
    %v2529 = vld [vmem:[%s7 + $0x8] sm:$0xff]
    %v2530 = vld [vmem:[%s7 + $0x10] sm:$0xff]
    %v2531 = vld [vmem:[%s7 + $0x18] sm:$0xff]
    %v2532 = vld [vmem:[%s7 + $0x20] sm:$0xff]
    %v2533 = vld [vmem:[%s7 + $0x28] sm:$0xff]
    %v2534 = vld [vmem:[%s7 + $0x30] sm:$0xff]
    %v2535 = vld [vmem:[%s7 + $0x38] sm:$0xff]
    %v2536 = vld [vmem:[%s7 + $0x40] sm:$0xff]
    %v2537 = vld [vmem:[%s7 + $0x48] sm:$0xff]
    %v2538 = vld [vmem:[%s7 + $0x50] sm:$0xff]
    %v2539 = vld [vmem:[%s7 + $0x58] sm:$0xff]
    %v2540 = vld [vmem:[%s7 + $0x60] sm:$0xff]
    %v2541 = vld [vmem:[%s7 + $0x68] sm:$0xff]
    %v2542 = vld [vmem:[%s7 + $0x70] sm:$0xff]
    %v2543 = vld [vmem:[%s7 + $0x78] sm:$0xff]
    %v2544 = vld [vmem:[%s7 + $0x80] sm:$0xff]
    %v2545 = vld [vmem:[%s7 + $0x88] sm:$0xff]
    %v2546 = vld [vmem:[%s7 + $0x90] sm:$0xff]
    %v2547 = vld [vmem:[%s7 + $0x98] sm:$0xff]
    %v2548 = vld [vmem:[%s7 + $0xa0] sm:$0xff]
    %v2549 = vld [vmem:[%s7 + $0xa8] sm:$0xff]
    %v2550 = vld [vmem:[%s7 + $0xb0] sm:$0xff]
    %v2551 = vld [vmem:[%s7 + $0xb8] sm:$0xff]
    %v2552 = vld [vmem:[%s7 + $0xc0] sm:$0xff]
    %v2553 = vld [vmem:[%s7 + $0xc8] sm:$0xff]
    %v2554 = vld [vmem:[%s7 + $0xd0] sm:$0xff]
    %v2555 = vld [vmem:[%s7 + $0xd8] sm:$0xff]
    %v2556 = vld [vmem:[%s7 + $0xe0] sm:$0xff]
    %v2557 = vld [vmem:[%s7 + $0xe8] sm:$0xff]
    %v2558 = vld [vmem:[%s7 + $0xf0] sm:$0xff]
    %v2559 = vld [vmem:[%s7 + $0xf8] sm:$0xff]
    %v2560 = vld [vmem:[%s8] sm:$0x1]
    %v2562 = vlaneseq
    %v2563 = vshrl.u32 %v2562, 7
    %v2564 = vsub.s32 0, %v2563
    %v2565 = vrot.slane %v2560, %v2564
    %vm2583 = vcmask 1041409
    %v2584 = vsel %vm2583, %v2449, %v2437
    %vm2585 = vcmask 1042434
    %v2586 = vsel %vm2585, %v2461, %v2584
    %vm2587 = vcmask 1043459
    %v2588 = vsel %vm2587, %v2473, %v2586
    %vm2589 = vcmask 1044484
    %v2590 = vsel %vm2589, %v2485, %v2588
    %vm2591 = vcmask 1045509
    %v2592 = vsel %vm2591, %v2497, %v2590
    %vm2593 = vcmask 1046534
    %v2594 = vsel %vm2593, %v2509, %v2592
    %vm2595 = vcmask 1047559
    %v2596 = vsel %vm2595, %v2521, %v2594
    %v2597 = vsel %vm2583, %v2455, %v2443
    %v2598 = vsel %vm2585, %v2467, %v2597
    %v2599 = vsel %vm2587, %v2479, %v2598
    %v2600 = vsel %vm2589, %v2491, %v2599
    %v2601 = vsel %vm2591, %v2503, %v2600
    %v2602 = vsel %vm2593, %v2515, %v2601
    %v2603 = vsel %vm2595, %v2527, %v2602
    %2606 = vmatprep.subr.mxu0 0.0
    %2607 = vmatpush1.msra.mxu0 %v2528
    %2608 = vmatprep.subr.mxu0 0.0
    %2609 = vmatpush1.msra.mxu0 %v2529
    %2610 = vmatprep.subr.mxu0 0.0
    %2611 = vmatpush1.msra.mxu0 %v2530
    %2612 = vmatprep.subr.mxu0 0.0
    %2613 = vmatpush1.msra.mxu0 %v2531
    %2614 = vmatprep.subr.mxu0 0.0
    %2615 = vmatpush1.msra.mxu0 %v2532
    %2616 = vmatprep.subr.mxu0 0.0
    %2617 = vmatpush1.msra.mxu0 %v2533
    %2618 = vmatprep.subr.mxu0 0.0
    %2619 = vmatpush1.msra.mxu0 %v2534
    %2620 = vmatprep.subr.mxu0 0.0
    %2621 = vmatpush1.msra.mxu0 %v2535
    %2622 = vmatprep.subr.mxu0 0.0
    %2623 = vmatpush1.msra.mxu0 %v2536
    %2624 = vmatprep.subr.mxu0 0.0
    %2625 = vmatpush1.msra.mxu0 %v2537
    %2626 = vmatprep.subr.mxu0 0.0
    %2627 = vmatpush1.msra.mxu0 %v2538
    %2628 = vmatprep.subr.mxu0 0.0
    %2629 = vmatpush1.msra.mxu0 %v2539
    %2630 = vmatprep.subr.mxu0 0.0
    %2631 = vmatpush1.msra.mxu0 %v2540
    %2632 = vmatprep.subr.mxu0 0.0
    %2633 = vmatpush1.msra.mxu0 %v2541
    %2634 = vmatprep.subr.mxu0 0.0
    %2635 = vmatpush1.msra.mxu0 %v2542
    %2636 = vmatprep.subr.mxu0 0.0
    %2637 = vmatpush1.msra.mxu0 %v2543
    %2638 = vmatprep.subr.mxu0 0.0
    %2639 = vmatpush1.msra.mxu0 %v2544
    %2640 = vmatprep.subr.mxu0 0.0
    %2641 = vmatpush1.msra.mxu0 %v2545
    %2642 = vmatprep.subr.mxu0 0.0
    %2643 = vmatpush1.msra.mxu0 %v2546
    %2644 = vmatprep.subr.mxu0 0.0
    %2645 = vmatpush1.msra.mxu0 %v2547
    %2646 = vmatprep.subr.mxu0 0.0
    %2647 = vmatpush1.msra.mxu0 %v2548
    %2648 = vmatprep.subr.mxu0 0.0
    %2649 = vmatpush1.msra.mxu0 %v2549
    %2650 = vmatprep.subr.mxu0 0.0
    %2651 = vmatpush1.msra.mxu0 %v2550
    %2652 = vmatprep.subr.mxu0 0.0
    %2653 = vmatpush1.msra.mxu0 %v2551
    %2654 = vmatprep.subr.mxu0 0.0
    %2655 = vmatpush1.msra.mxu0 %v2552
    %2656 = vmatprep.subr.mxu0 0.0
    %2657 = vmatpush1.msra.mxu0 %v2553
    %2658 = vmatprep.subr.mxu0 0.0
    %2659 = vmatpush1.msra.mxu0 %v2554
    %2660 = vmatprep.subr.mxu0 0.0
    %2661 = vmatpush1.msra.mxu0 %v2555
    %2662 = vmatprep.subr.mxu0 0.0
    %2663 = vmatpush1.msra.mxu0 %v2556
    %2664 = vmatprep.subr.mxu0 0.0
    %2665 = vmatpush1.msra.mxu0 %v2557
    %2666 = vmatprep.subr.mxu0 0.0
    %2667 = vmatpush1.msra.mxu0 %v2558
    %2668 = vmatprep.subr.mxu0 0.0
    %2669 = vmatpush1.msra.mxu0 %v2559
    %2670 = vmatprep.mubr.f32.mxu0 %v2603
    %2671 = vmatmul.mubr.f32.gmra.mrb[0].mxu0 %v2596
    %v2672 = vpop.f32.mrb[0].mxu0
    %v2673 = vadd.f32 %v2565, %v2672
    %v2674 = vpop.f32.mrb[0].mxu0
    %2675 = vdwg.mxu0
    %v2676 = vmax.f32 %v2673, 0.0
    %v2677 = vld [vmem:[%s9] sm:$0xff]
    %v2678 = vld [vmem:[%s9 + $0x8] sm:$0xff]
    %v2679 = vld [vmem:[%s10] sm:$0x3]
    %v2681 = vlaneseq
    %v2682 = vshrl.u32 %v2681, 7
    %v2683 = vsub.s32 0, %v2682
    %v2684 = vrot.slane %v2679, %v2683
    %v2685 = vlaneseq
    %v2686 = vshrl.u32 %v2685, 7
    %v2687 = vsub.s32 1, %v2686
    %v2688 = vrot.slane %v2679, %v2687
    %vm2691 = vcmask 64512
    %v2693 = vsel %vm2691, %v2676, 0
    %2695 = vmatprep.subr.mxu0 %v2678
    %2696 = vmatpush1.msra.mxu0 %v2677
    %2697 = vmatprep.subr.mxu0 0.0
    %2698 = vmatpush1.msra.mxu0 0.0
    %2699 = vmatprep.subr.mxu0 0.0
    %2700 = vmatpush1.msra.mxu0 0.0
    %2701 = vmatprep.subr.mxu0 0.0
    %2702 = vmatpush1.msra.mxu0 0.0
    %2703 = vmatprep.subr.mxu0 0.0
    %2704 = vmatpush1.msra.mxu0 0.0
    %2705 = vmatprep.subr.mxu0 0.0
    %2706 = vmatpush1.msra.mxu0 0.0
    %2707 = vmatprep.subr.mxu0 0.0
    %2708 = vmatpush1.msra.mxu0 0.0
    %2709 = vmatprep.subr.mxu0 0.0
    %2710 = vmatpush1.msra.mxu0 0.0
    %2711 = vmatprep.subr.mxu0 0.0
    %2712 = vmatpush1.msra.mxu0 0.0
    %2713 = vmatprep.subr.mxu0 0.0
    %2714 = vmatpush1.msra.mxu0 0.0
    %2715 = vmatprep.subr.mxu0 0.0
    %2716 = vmatpush1.msra.mxu0 0.0
    %2717 = vmatprep.subr.mxu0 0.0
    %2718 = vmatpush1.msra.mxu0 0.0
    %2719 = vmatprep.subr.mxu0 0.0
    %2720 = vmatpush1.msra.mxu0 0.0
    %2721 = vmatprep.subr.mxu0 0.0
    %2722 = vmatpush1.msra.mxu0 0.0
    %2723 = vmatprep.subr.mxu0 0.0
    %2724 = vmatpush1.msra.mxu0 0.0
    %2725 = vmatprep.subr.mxu0 0.0
    %2726 = vmatpush1.msra.mxu0 0.0
    %2727 = vmatprep.subr.mxu0 0.0
    %2728 = vmatpush1.msra.mxu0 0.0
    %2729 = vmatprep.subr.mxu0 0.0
    %2730 = vmatpush1.msra.mxu0 0.0
    %2731 = vmatprep.subr.mxu0 0.0
    %2732 = vmatpush1.msra.mxu0 0.0
    %2733 = vmatprep.subr.mxu0 0.0
    %2734 = vmatpush1.msra.mxu0 0.0
    %2735 = vmatprep.subr.mxu0 0.0
    %2736 = vmatpush1.msra.mxu0 0.0
    %2737 = vmatprep.subr.mxu0 0.0
    %2738 = vmatpush1.msra.mxu0 0.0
    %2739 = vmatprep.subr.mxu0 0.0
    %2740 = vmatpush1.msra.mxu0 0.0
    %2741 = vmatprep.subr.mxu0 0.0
    %2742 = vmatpush1.msra.mxu0 0.0
    %2743 = vmatprep.subr.mxu0 0.0
    %2744 = vmatpush1.msra.mxu0 0.0
    %2745 = vmatprep.subr.mxu0 0.0
    %2746 = vmatpush1.msra.mxu0 0.0
    %2747 = vmatprep.subr.mxu0 0.0
    %2748 = vmatpush1.msra.mxu0 0.0
    %2749 = vmatprep.subr.mxu0 0.0
    %2750 = vmatpush1.msra.mxu0 0.0
    %2751 = vmatprep.subr.mxu0 0.0
    %2752 = vmatpush1.msra.mxu0 0.0
    %2753 = vmatprep.subr.mxu0 0.0
    %2754 = vmatpush1.msra.mxu0 0.0
    %2755 = vmatprep.subr.mxu0 0.0
    %2756 = vmatpush1.msra.mxu0 0.0
    %2757 = vmatprep.subr.mxu0 0.0
    %2758 = vmatpush1.msra.mxu0 0.0
    %2759 = vmatprep.mubr.f32.mxu0 0.0
    %2760 = vmatmul.mubr.f32.gmra.mrb[0].mxu0 %v2693
    %v2761 = vpop.f32.mrb[0].mxu0
    %v2762 = vadd.f32 %v2684, %v2761
    %v2763 = vpop.f32.mrb[0].mxu0
    %v2764 = vadd.f32 %v2688, %v2763
    %2765 = vdwg.mxu0
    %v2766 = vsub.f32 0.0, %v2762
    %v2767 = vsub.f32 0.0, %v2764
    %v2768 = vmul.f32 %v2766, 1.442695
    %v2769 = vpow.pop %v2768
    %v2770 = vmul.f32 %v2767, 1.442695
    %v2771 = vpow.pop %v2770
    %v2772 = vadd.f32 %v2769, 1.0
    %v2773 = vadd.f32 %v2771, 1.0
    %v2774 = vrcp.pop %v2772
    %v2775 = vmul.f32 1.0, %v2774
    %v2776 = vrcp.pop %v2773
    %v2777 = vmul.f32 1.0, %v2776
    %v2780 = vcombine.low %v2775, %v2777
    %v2781 = vcombine.high %v2775, %v2777
    %v2783 = vunpack.c.l.s4 1966171168
    %v2784 = vunpack.c.0.s8 %v2783
    %v2785 = vlaneseq
    %v2786 = vshrl.u32 %v2785, 7
    %v2787 = vsub.s32 %v2784, %v2786
    %v2788 = vrot.slane %v2780, %v2787
    %v2790 = vunpack.c.l.s4 1966171168
    %v2791 = vunpack.c.0.s8 %v2790
    %v2792 = vlaneseq
    %v2793 = vshrl.u32 %v2792, 7
    %v2794 = vsub.s32 %v2791, %v2793
    %v2795 = vrot.slane %v2781, %v2794
    %v2796 = vcombine.high %v2788, %v2788
    %v2797 = vcombine.high %v2795, %v2795
    %v2799 = vunpack.c.l.s4 1966171168
    %v2800 = vunpack.c.0.s8 %v2799
    %v2801 = vlaneseq
    %v2802 = vshrl.u32 %v2801, 7
    %v2803 = vsub.s32 %v2800, %v2802
    %v2804 = vrot.slane %v2788, %v2803
    %v2806 = vunpack.c.l.s4 1966171168
    %v2807 = vunpack.c.0.s8 %v2806
    %v2808 = vlaneseq
    %v2809 = vshrl.u32 %v2808, 7
    %v2810 = vsub.s32 %v2807, %v2809
    %v2811 = vrot.slane %v2795, %v2810
    %v2813 = vunpack.c.l.s4 1966171168
    %v2814 = vunpack.c.0.s8 %v2813
    %v2815 = vlaneseq
    %v2816 = vshrl.u32 %v2815, 7
    %v2817 = vsub.s32 %v2814, %v2816
    %v2818 = vrot.slane %v2796, %v2817
    %v2820 = vunpack.c.l.s4 1966171168
    %v2821 = vunpack.c.0.s8 %v2820
    %v2822 = vlaneseq
    %v2823 = vshrl.u32 %v2822, 7
    %v2824 = vsub.s32 %v2821, %v2823
    %v2825 = vrot.slane %v2797, %v2824
    %v2826 = vcombine.high %v2804, %v2804
    %v2827 = vcombine.high %v2811, %v2811
    %v2828 = vcombine.high %v2818, %v2818
    %v2829 = vcombine.high %v2825, %v2825
    %v2830 = vlaneseq
    %v2831 = vshrl.u32 %v2830, 7
    %v2832 = vsub.s32 0, %v2831
    %v2833 = vrot.slane %v2804, %v2832
    %v2834 = vlaneseq
    %v2835 = vshrl.u32 %v2834, 7
    %v2836 = vsub.s32 1, %v2835
    %v2837 = vrot.slane %v2804, %v2836
    %v2838 = vlaneseq
    %v2839 = vshrl.u32 %v2838, 7
    %v2840 = vsub.s32 0, %v2839
    %v2841 = vrot.slane %v2818, %v2840
    %v2842 = vlaneseq
    %v2843 = vshrl.u32 %v2842, 7
    %v2844 = vsub.s32 1, %v2843
    %v2845 = vrot.slane %v2818, %v2844
    %v2846 = vlaneseq
    %v2847 = vshrl.u32 %v2846, 7
    %v2848 = vsub.s32 0, %v2847
    %v2849 = vrot.slane %v2826, %v2848
    %v2850 = vlaneseq
    %v2851 = vshrl.u32 %v2850, 7
    %v2852 = vsub.s32 1, %v2851
    %v2853 = vrot.slane %v2826, %v2852
    %v2854 = vlaneseq
    %v2855 = vshrl.u32 %v2854, 7
    %v2856 = vsub.s32 0, %v2855
    %v2857 = vrot.slane %v2828, %v2856
    %v2858 = vlaneseq
    %v2859 = vshrl.u32 %v2858, 7
    %v2860 = vsub.s32 1, %v2859
    %v2861 = vrot.slane %v2828, %v2860
    %v2862 = vlaneseq
    %v2863 = vshrl.u32 %v2862, 7
    %v2864 = vsub.s32 0, %v2863
    %v2865 = vrot.slane %v2811, %v2864
    %v2866 = vlaneseq
    %v2867 = vshrl.u32 %v2866, 7
    %v2868 = vsub.s32 1, %v2867
    %v2869 = vrot.slane %v2811, %v2868
    %v2870 = vlaneseq
    %v2871 = vshrl.u32 %v2870, 7
    %v2872 = vsub.s32 0, %v2871
    %v2873 = vrot.slane %v2825, %v2872
    %v2874 = vlaneseq
    %v2875 = vshrl.u32 %v2874, 7
    %v2876 = vsub.s32 1, %v2875
    %v2877 = vrot.slane %v2825, %v2876
    %v2878 = vlaneseq
    %v2879 = vshrl.u32 %v2878, 7
    %v2880 = vsub.s32 0, %v2879
    %v2881 = vrot.slane %v2827, %v2880
    %v2882 = vlaneseq
    %v2883 = vshrl.u32 %v2882, 7
    %v2884 = vsub.s32 1, %v2883
    %v2885 = vrot.slane %v2827, %v2884
    %v2886 = vlaneseq
    %v2887 = vshrl.u32 %v2886, 7
    %v2888 = vsub.s32 0, %v2887
    %v2889 = vrot.slane %v2829, %v2888
    %v2890 = vlaneseq
    %v2891 = vshrl.u32 %v2890, 7
    %v2892 = vsub.s32 1, %v2891
    %v2893 = vrot.slane %v2829, %v2892
    %v2910 = vmul.f32 %v2416, %v2833
    %v2911 = vmul.f32 %v2417, %v2837
    %v2912 = vmul.f32 %v2418, %v2841
    %v2913 = vmul.f32 %v2419, %v2845
    %v2914 = vmul.f32 %v2420, %v2849
    %v2915 = vmul.f32 %v2421, %v2853
    %v2916 = vmul.f32 %v2422, %v2857
    %v2917 = vmul.f32 %v2423, %v2861
    %v2918 = vmul.f32 %v2424, %v2865
    %v2919 = vmul.f32 %v2425, %v2869
    %v2920 = vmul.f32 %v2426, %v2873
    %v2921 = vmul.f32 %v2427, %v2877
    %v2922 = vmul.f32 %v2428, %v2881
    %v2923 = vmul.f32 %v2429, %v2885
    %v2924 = vmul.f32 %v2430, %v2889
    %v2925 = vmul.f32 %v2431, %v2893
    %v2926 = vadd.f32 %v2910, %v52
    %v2927 = vadd.f32 %v2911, %v53
    %v2928 = vadd.f32 %v2912, %v54
    %v2929 = vadd.f32 %v2913, %v55
    %v2930 = vadd.f32 %v2914, %v56
    %v2931 = vadd.f32 %v2915, %v57
    %v2932 = vadd.f32 %v2916, %v58
    %v2933 = vadd.f32 %v2917, %v59
    %v2934 = vadd.f32 %v2918, %v60
    %v2935 = vadd.f32 %v2919, %v61
    %v2936 = vadd.f32 %v2920, %v62
    %v2937 = vadd.f32 %v2921, %v63
    %v2938 = vadd.f32 %v2922, %v64
    %v2939 = vadd.f32 %v2923, %v65
    %v2940 = vadd.f32 %v2924, %v66
    %v2941 = vadd.f32 %v2925, %v67
    %v2942 = vmax.f32 %v2926, 0.0
    %v2943 = vmax.f32 %v2927, 0.0
    %v2944 = vmax.f32 %v2928, 0.0
    %v2945 = vmax.f32 %v2929, 0.0
    %v2946 = vmax.f32 %v2930, 0.0
    %v2947 = vmax.f32 %v2931, 0.0
    %v2948 = vmax.f32 %v2932, 0.0
    %v2949 = vmax.f32 %v2933, 0.0
    %v2950 = vmax.f32 %v2934, 0.0
    %v2951 = vmax.f32 %v2935, 0.0
    %v2952 = vmax.f32 %v2936, 0.0
    %v2953 = vmax.f32 %v2937, 0.0
    %v2954 = vmax.f32 %v2938, 0.0
    %v2955 = vmax.f32 %v2939, 0.0
    %v2956 = vmax.f32 %v2940, 0.0
    %v2957 = vmax.f32 %v2941, 0.0
    %2958 = vst [vmem:[%s11] sm:$0xff] %v2942
    %2959 = vst [vmem:[%s11 + $0x8] sm:$0xff] %v2943
    %2960 = vst [vmem:[%s11 + $0x10] sm:$0xff] %v2944
    %2961 = vst [vmem:[%s11 + $0x18] sm:$0xff] %v2945
    %2962 = vst [vmem:[%s11 + $0x20] sm:$0xff] %v2946
    %2963 = vst [vmem:[%s11 + $0x28] sm:$0xff] %v2947
    %2964 = vst [vmem:[%s11 + $0x30] sm:$0xff] %v2948
    %2965 = vst [vmem:[%s11 + $0x38] sm:$0xff] %v2949
    %2966 = vst [vmem:[%s11 + $0x40] sm:$0xff] %v2950
    %2967 = vst [vmem:[%s11 + $0x48] sm:$0xff] %v2951
    %2968 = vst [vmem:[%s11 + $0x50] sm:$0xff] %v2952
    %2969 = vst [vmem:[%s11 + $0x58] sm:$0xff] %v2953
    %2970 = vst [vmem:[%s11 + $0x60] sm:$0xff] %v2954
    %2971 = vst [vmem:[%s11 + $0x68] sm:$0xff] %v2955
    %2972 = vst [vmem:[%s11 + $0x70] sm:$0xff] %v2956
    %2973 = vst [vmem:[%s11 + $0x78] sm:$0xff] %v2957
    // Predicated region
    $region50: #{residual_block_nhwc.1} parent=1 // pred_check
      _
    $region51: #{residual_block_nhwc.1} parent=1 // pred_check_branch
      %2975 = sbr.rel (0) target = $region53
    $region52: #{residual_block_nhwc.1} parent=1 // pred_region
      _
    $region53: #{residual_block_nhwc.1} parent=1 // pred_fallthru
      _
    // Predicated region
    $region54: #{residual_block_nhwc.1} parent=1 // pred_check
      _
    $region55: #{residual_block_nhwc.1} parent=1 // pred_check_branch
      %2977 = sbr.rel (0) target = $region57
    $region56: #{residual_block_nhwc.1} parent=1 // pred_region
      _
    $region57: #{residual_block_nhwc.1} parent=1 // pred_fallthru
      _
    %2978 = vsyncpa [#allocation3], 1

</llo_original>
